<compile_context>
chip_gen: v7x
topology: tpu7x:2x2x1
jax: 0.10.0
libtpu: 0.0.40
codegen_flags: <defaults>
</compile_context>

<pallas_src>
import jax
import jax.numpy as jnp
from jax.experimental import pallas as pl
from jax.experimental.pallas import tpu as pltpu


HIDDEN = 768
FC1 = 512
FC2 = 256
LANE_MIN = 128        # fc3 output lane-padded to at least one full 128-lane vreg
NEG_BIG = -1e30       # Python float -> jaxpr literal (NOT a captured jax.Array)


def _round_up(v, m):
    return ((v + m - 1) // m) * m


def _choose_tb(batch, cap=512):
    """Batch-tile rows.

    Large tiles amortize the ~0.35 us per-grid-step overhead and fill the
    256-row MXU pass on v6e/v7x, but we keep >= 2 grid steps when the batch is
    big enough so the single "parallel" axis can shard across v7x's two
    TensorCores. Rows are a multiple of 16 (bf16 sublane packing) unless the
    tile covers the full batch exactly.
    """
    if batch <= 16:
        return batch                      # one block == whole array, no ragged edge
    if batch <= 32:
        return 16
    return min(cap, _round_up(pl.cdiv(batch, 2), 16))


def _head_kernel(x_ref, w1_ref, b1_ref, w2_ref, b2_ref, w3_ref, b3_ref, o_ref):
    # x: (tb, 768) bf16; all matmuls hit the MXU in bf16 with f32 accumulation,
    # bias/ReLU/log-softmax epilogue in f32 (v5e-safe: no bf16 VPU/EUP there).
    x = x_ref[...]

    # fc1 + ReLU (dropout == identity in eval mode).
    h1 = jnp.dot(x, w1_ref[...], preferred_element_type=jnp.float32) + b1_ref[...]
    h1 = jnp.maximum(h1, 0.0)

    # fc2 + ReLU (re-cast activation to bf16 only for the MXU input).
    h2 = jnp.dot(h1.astype(jnp.bfloat16), w2_ref[...],
                 preferred_element_type=jnp.float32) + b2_ref[...]
    h2 = jnp.maximum(h2, 0.0)

    # fc3 into a lane-dense (tb, 128) buffer. The label mask is baked into b3:
    # padded bias lanes are -1e30 and the padded w3 columns are zero, so the
    # padded logits come out of the MXU epilogue already masked.
    logits = jnp.dot(h2.astype(jnp.bfloat16), w3_ref[...],
                     preferred_element_type=jnp.float32) + b3_ref[...]

    # Numerically stable LogSoftmax over dim=1 (labels axis), f32 throughout;
    # exp() of the -1e30 padded lanes cleanly underflows to 0.
    m = jnp.max(logits, axis=1, keepdims=True)
    z = logits - m
    lse = jnp.log(jnp.sum(jnp.exp(z), axis=1, keepdims=True))
    o_ref[...] = (z - lse).astype(o_ref.dtype)


def prepare_params(params, labels):
    """One-time prep OUTSIDE the per-call hot path: cast weights to bf16 for
    the MXU, biases to f32, lane-pad fc3 to a multiple of 128 and bake the
    label mask into the padded bias lanes."""
    lane_pad = max(LANE_MIN, _round_up(labels, 128))
    w3 = jnp.pad(params["w3"].astype(jnp.bfloat16),
                 ((0, 0), (0, lane_pad - labels)))                  # zero columns
    b3 = jnp.pad(params["b3"].astype(jnp.float32),
                 ((0, 0), (0, lane_pad - labels)),
                 constant_values=NEG_BIG)                           # mask lanes
    return {
        "w1": params["w1"].astype(jnp.bfloat16),
        "b1": params["b1"].astype(jnp.float32),
        "w2": params["w2"].astype(jnp.bfloat16),
        "b2": params["b2"].astype(jnp.float32),
        "w3": w3,
        "b3": b3,
    }


def bert_arch_head(cls_hs, prepared, labels, *, tb_cap=512):
    """Fused classifier head. cls_hs: (B, 768) -> (B, labels) log-probs."""
    B = cls_hs.shape[0]
    lane_pad = prepared["w3"].shape[1]
    tb = _choose_tb(B, tb_cap)
    n_steps = pl.cdiv(B, tb)

    # bf16 activations for the MXU. No explicit batch pad: Pallas handles a
    # ragged last block (stores masked; garbage rows never reach the caller).
    x = cls_hs.astype(jnp.bfloat16)

    # Weights/biases: constant index_map -> same block every step, so they stay
    # resident in VMEM and are DMA'd from HBM only once.
    resident = lambda shape: pl.BlockSpec(shape, lambda i: (0, 0))

    out = pl.pallas_call(
        _head_kernel,
        out_shape=jax.ShapeDtypeStruct((B, lane_pad), jnp.bfloat16),
        grid=(n_steps,),
        in_specs=[
            pl.BlockSpec((tb, HIDDEN), lambda i: (i, 0)),   # x tile, pipelined
            resident((HIDDEN, FC1)), resident((1, FC1)),
            resident((FC1, FC2)),    resident((1, FC2)),
            resident((FC2, lane_pad)), resident((1, lane_pad)),
        ],
        out_specs=pl.BlockSpec((tb, lane_pad), lambda i: (i, 0)),
        compiler_params=pltpu.CompilerParams(
            dimension_semantics=("parallel",),
            vmem_limit_bytes=64 * 1024 * 1024),   # headroom (v5e) if tb_cap is raised
    )(x, prepared["w1"], prepared["b1"], prepared["w2"], prepared["b2"],
      prepared["w3"], prepared["b3"])

    return out[:, :labels].astype(jnp.float32)


def init_params(key, labels):
    """Deterministic init of the head parameters (shapes from BERT_Arch.__init__)."""
    k1, k2, k3, k4, k5, k6 = jax.random.split(key, 6)
    # Stored as (in, out) so the kernel computes x @ W + b (== PyTorch
    # x @ W.T + b with W_torch of shape (out, in)).
    return {
        "w1": jax.random.normal(k1, (HIDDEN, FC1), jnp.float32) * 0.02,
        "b1": jax.random.normal(k2, (1, FC1), jnp.float32) * 0.02,
        "w2": jax.random.normal(k3, (FC1, FC2), jnp.float32) * 0.02,
        "b2": jax.random.normal(k4, (1, FC2), jnp.float32) * 0.02,
        "w3": jax.random.normal(k5, (FC2, labels), jnp.float32) * 0.02,
        "b3": jax.random.normal(k6, (1, labels), jnp.float32) * 0.02,
    }


def surrogate_bert_cls(sent_id, mask, embed_table):
    """Stand-in for self.bert(sent_id, attention_mask=mask)[0][:, 0].

    Deterministic: token-embedding lookup, masked, CLS position (index 0).
    Plain-JAX glue; not part of the Pallas hot path.
    """
    emb = jnp.take(embed_table, sent_id, axis=0)            # (B, S, 768)
    emb = emb * mask[..., None].astype(emb.dtype)           # apply attention mask
    return emb[:, 0, :]                                     # CLS hidden state (B, 768)


def _head_reference(cls_hs, params, labels):
    """Pure-JAX reference with the same bf16 MXU / f32 epilogue recipe."""
    x = cls_hs.astype(jnp.bfloat16)
    w1 = params["w1"].astype(jnp.bfloat16)
    w2 = params["w2"].astype(jnp.bfloat16)
    w3 = params["w3"].astype(jnp.bfloat16)
    h1 = jnp.maximum(
        jnp.dot(x, w1, preferred_element_type=jnp.float32) + params["b1"], 0.0)
    h2 = jnp.maximum(
        jnp.dot(h1.astype(jnp.bfloat16), w2, preferred_element_type=jnp.float32)
        + params["b2"], 0.0)
    logits = (jnp.dot(h2.astype(jnp.bfloat16), w3,
                      preferred_element_type=jnp.float32) + params["b3"])
    return jax.nn.log_softmax(logits, axis=1)


if __name__ == "__main__":
    B, S = 2, 8          # batch, sequence length
    VOCAB = 64
    LABELS = 6

    key = jax.random.PRNGKey(0)
    k_params, k_embed, k_ids = jax.random.split(key, 3)

    raw_params = init_params(k_params, LABELS)
    prepared = prepare_params(raw_params, LABELS)           # one-time cast/pad
    embed_table = jax.random.normal(k_embed, (VOCAB, HIDDEN), jnp.float32) * 0.02

    sent_id = jax.random.randint(k_ids, (B, S), 0, VOCAB, dtype=jnp.int32)
    mask = jnp.ones((B, S), dtype=jnp.int32)

    cls_hs = surrogate_bert_cls(sent_id, mask, embed_table)     # (B, 768)
    log_probs = bert_arch_head(cls_hs, prepared, LABELS)        # (B, LABELS)
    jax.block_until_ready(log_probs)

    # sanity: shape, normalization, and agreement with a pure-JAX reference
    # (output is stored bf16 in the kernel, hence the slightly looser atol).
    assert log_probs.shape == (B, LABELS)
    assert jnp.allclose(jnp.exp(log_probs).sum(axis=1), 1.0, atol=2e-2)
    ref = _head_reference(cls_hs, raw_params, LABELS)
    assert jnp.allclose(log_probs, ref, atol=3e-2), "mismatch vs reference"

    print("KERNEL_OK")
</pallas_src>

<mosaic_0001>
module attributes {stable_mosaic.version = 11 : i64} {
  func.func @_head_kernel(%arg0: i32, %arg1: memref<2x768xbf16, #tpu.memory_space<vmem>>, %arg2: memref<768x512xbf16, #tpu.memory_space<vmem>>, %arg3: memref<1x512xf32, #tpu.memory_space<vmem>>, %arg4: memref<512x256xbf16, #tpu.memory_space<vmem>>, %arg5: memref<1x256xf32, #tpu.memory_space<vmem>>, %arg6: memref<256x128xbf16, #tpu.memory_space<vmem>>, %arg7: memref<1x128xf32, #tpu.memory_space<vmem>>, %arg8: memref<2x128xbf16, #tpu.memory_space<vmem>>) attributes {dimension_semantics = [#tpu.dimension_semantics<parallel>], iteration_bounds = array<i64: 1>, scalar_prefetch = 0 : i64, scratch_operands = 0 : i64, tpu.core_type = #tpu.core_type<tc>, window_params = [{transform_indices = @transform_0, window_bounds = array<i64: 2, 768>}, {pipeline_mode = #tpu.pipeline_mode<synchronous>, transform_indices = @transform_1, window_bounds = array<i64: 768, 512>}, {pipeline_mode = #tpu.pipeline_mode<synchronous>, transform_indices = @transform_2, window_bounds = array<i64: 1, 512>}, {pipeline_mode = #tpu.pipeline_mode<synchronous>, transform_indices = @transform_3, window_bounds = array<i64: 512, 256>}, {pipeline_mode = #tpu.pipeline_mode<synchronous>, transform_indices = @transform_4, window_bounds = array<i64: 1, 256>}, {pipeline_mode = #tpu.pipeline_mode<synchronous>, transform_indices = @transform_5, window_bounds = array<i64: 256, 128>}, {pipeline_mode = #tpu.pipeline_mode<synchronous>, transform_indices = @transform_6, window_bounds = array<i64: 1, 128>}, {transform_indices = @transform_7, window_bounds = array<i64: 2, 128>}]} {
    %c0 = arith.constant 0 : index
    %c0_0 = arith.constant 0 : index
    %0 = vector.load %arg1[%c0, %c0_0] : memref<2x768xbf16, #tpu.memory_space<vmem>>, vector<2x768xbf16>
    %c0_1 = arith.constant 0 : index
    %c0_2 = arith.constant 0 : index
    %1 = vector.load %arg2[%c0_1, %c0_2] : memref<768x512xbf16, #tpu.memory_space<vmem>>, vector<768x512xbf16>
    %cst = arith.constant dense<0.000000e+00> : vector<2x512xf32>
    %2 = tpu.matmul %0, %1, %cst {dimension_numbers = #tpu.dot_dimension_numbers<[1], [0], [0], [1], [0, 0, 1, 1], [], []>} : vector<2x768xbf16>, vector<768x512xbf16>, vector<2x512xf32> -> vector<2x512xf32>
    %c0_3 = arith.constant 0 : index
    %c0_4 = arith.constant 0 : index
    %3 = vector.load %arg3[%c0_3, %c0_4] : memref<1x512xf32, #tpu.memory_space<vmem>>, vector<1x512xf32>
    %4 = vector.broadcast %3 : vector<1x512xf32> to vector<2x512xf32>
    %5 = arith.addf %2, %4 : vector<2x512xf32>
    %cst_5 = arith.constant 0.000000e+00 : f32
    %6 = vector.broadcast %cst_5 : f32 to vector<2x512xf32>
    %7 = arith.maximumf %5, %6 : vector<2x512xf32>
    %8 = arith.truncf %7 : vector<2x512xf32> to vector<2x512xbf16>
    %c0_6 = arith.constant 0 : index
    %c0_7 = arith.constant 0 : index
    %9 = vector.load %arg4[%c0_6, %c0_7] : memref<512x256xbf16, #tpu.memory_space<vmem>>, vector<512x256xbf16>
    %cst_8 = arith.constant dense<0.000000e+00> : vector<2x256xf32>
    %10 = tpu.matmul %8, %9, %cst_8 {dimension_numbers = #tpu.dot_dimension_numbers<[1], [0], [0], [1], [0, 0, 1, 1], [], []>} : vector<2x512xbf16>, vector<512x256xbf16>, vector<2x256xf32> -> vector<2x256xf32>
    %c0_9 = arith.constant 0 : index
    %c0_10 = arith.constant 0 : index
    %11 = vector.load %arg5[%c0_9, %c0_10] : memref<1x256xf32, #tpu.memory_space<vmem>>, vector<1x256xf32>
    %12 = vector.broadcast %11 : vector<1x256xf32> to vector<2x256xf32>
    %13 = arith.addf %10, %12 : vector<2x256xf32>
    %cst_11 = arith.constant 0.000000e+00 : f32
    %14 = vector.broadcast %cst_11 : f32 to vector<2x256xf32>
    %15 = arith.maximumf %13, %14 : vector<2x256xf32>
    %16 = arith.truncf %15 : vector<2x256xf32> to vector<2x256xbf16>
    %c0_12 = arith.constant 0 : index
    %c0_13 = arith.constant 0 : index
    %17 = vector.load %arg6[%c0_12, %c0_13] : memref<256x128xbf16, #tpu.memory_space<vmem>>, vector<256x128xbf16>
    %cst_14 = arith.constant dense<0.000000e+00> : vector<2x128xf32>
    %18 = tpu.matmul %16, %17, %cst_14 {dimension_numbers = #tpu.dot_dimension_numbers<[1], [0], [0], [1], [0, 0, 1, 1], [], []>} : vector<2x256xbf16>, vector<256x128xbf16>, vector<2x128xf32> -> vector<2x128xf32>
    %c0_15 = arith.constant 0 : index
    %c0_16 = arith.constant 0 : index
    %19 = vector.load %arg7[%c0_15, %c0_16] : memref<1x128xf32, #tpu.memory_space<vmem>>, vector<1x128xf32>
    %20 = vector.broadcast %19 : vector<1x128xf32> to vector<2x128xf32>
    %21 = arith.addf %18, %20 : vector<2x128xf32>
    %cst_17 = arith.constant dense<0xFF800000> : vector<2xf32>
    %22 = vector.multi_reduction <maximumf>, %21, %cst_17 [1] : vector<2x128xf32> to vector<2xf32>
    %23 = vector.shape_cast %22 : vector<2xf32> to vector<2x1xf32>
    %24 = vector.broadcast %23 : vector<2x1xf32> to vector<2x128xf32>
    %25 = arith.subf %21, %24 : vector<2x128xf32>
    %26 = math.exp %25 : vector<2x128xf32>
    %cst_18 = arith.constant dense<0.000000e+00> : vector<2xf32>
    %27 = vector.multi_reduction <add>, %26, %cst_18 [1] : vector<2x128xf32> to vector<2xf32>
    %28 = vector.shape_cast %27 : vector<2xf32> to vector<2x1xf32>
    %29 = math.log %28 : vector<2x1xf32>
    %30 = vector.broadcast %29 : vector<2x1xf32> to vector<2x128xf32>
    %31 = arith.subf %25, %30 : vector<2x128xf32>
    %32 = arith.truncf %31 : vector<2x128xf32> to vector<2x128xbf16>
    %c0_19 = arith.constant 0 : index
    %c0_20 = arith.constant 0 : index
    %33 = vector.load %arg8[%c0_19, %c0_20] : memref<2x128xbf16, #tpu.memory_space<vmem>>, vector<2x128xbf16>
    tpu.vector_store %arg8[%c0_19, %c0_20], %32 {strides = array<i32>} : memref<2x128xbf16, #tpu.memory_space<vmem>>, vector<2x128xbf16>,
    return
  }
  func.func @transform_0(%arg0: i32) -> (i32, i32) {
    %c0_i32 = arith.constant 0 : i32
    %c0_i32_0 = arith.constant 0 : i32
    return %arg0, %c0_i32 : i32, i32
  }
  func.func @transform_1(%arg0: i32) -> (i32, i32) {
    %c0_i32 = arith.constant 0 : i32
    %c0_i32_0 = arith.constant 0 : i32
    %c0_i32_1 = arith.constant 0 : i32
    return %c0_i32, %c0_i32_0 : i32, i32
  }
  func.func @transform_2(%arg0: i32) -> (i32, i32) {
    %c0_i32 = arith.constant 0 : i32
    %c0_i32_0 = arith.constant 0 : i32
    %c0_i32_1 = arith.constant 0 : i32
    return %c0_i32, %c0_i32_0 : i32, i32
  }
  func.func @transform_3(%arg0: i32) -> (i32, i32) {
    %c0_i32 = arith.constant 0 : i32
    %c0_i32_0 = arith.constant 0 : i32
    %c0_i32_1 = arith.constant 0 : i32
    return %c0_i32, %c0_i32_0 : i32, i32
  }
  func.func @transform_4(%arg0: i32) -> (i32, i32) {
    %c0_i32 = arith.constant 0 : i32
    %c0_i32_0 = arith.constant 0 : i32
    %c0_i32_1 = arith.constant 0 : i32
    return %c0_i32, %c0_i32_0 : i32, i32
  }
  func.func @transform_5(%arg0: i32) -> (i32, i32) {
    %c0_i32 = arith.constant 0 : i32
    %c0_i32_0 = arith.constant 0 : i32
    %c0_i32_1 = arith.constant 0 : i32
    return %c0_i32, %c0_i32_0 : i32, i32
  }
  func.func @transform_6(%arg0: i32) -> (i32, i32) {
    %c0_i32 = arith.constant 0 : i32
    %c0_i32_0 = arith.constant 0 : i32
    %c0_i32_1 = arith.constant 0 : i32
    return %c0_i32, %c0_i32_0 : i32, i32
  }
  func.func @transform_7(%arg0: i32) -> (i32, i32) {
    %c0_i32 = arith.constant 0 : i32
    %c0_i32_0 = arith.constant 0 : i32
    return %arg0, %c0_i32 : i32, i32
  }
}

</mosaic_0001>

<llo_original>
// kernel: tpu_custom_call.1
$region0: #{tpu_custom_call.1}
  #allocation0 [shape = 'u32[]', space=smem, size = 0x4, offset = 0x4, fixed_abs, tag = 'smem constant byte address 0x4 - core index']
  #allocation1 [shape = 'u32[144,128]{1,0:T(1,128)}', space=vmem, size = 0x12000, scoped, tag = 'internal scratch']
  %s0 = inlined_call_operand.hbm [shape: bf16[2,768], index: 0, kind: input, shape index: {}]
  %s1 = inlined_call_operand.hbm [shape: bf16[768,512], index: 1, kind: input, shape index: {}]
  %s2 = inlined_call_operand.hbm [shape: f32[1,512], index: 2, kind: input, shape index: {}]
  %s3 = inlined_call_operand.hbm [shape: bf16[512,256], index: 3, kind: input, shape index: {}]
  %s4 = inlined_call_operand.hbm [shape: f32[1,256], index: 4, kind: input, shape index: {}]
  %s5 = inlined_call_operand.hbm [shape: bf16[256,128], index: 5, kind: input, shape index: {}]
  %s6 = inlined_call_operand.hbm [shape: f32[1,128], index: 6, kind: input, shape index: {}]
  %s7 = inlined_call_operand.hbm [shape: bf16[2,128], index: 7, kind: output, shape index: {}]
  %s8 = sld [smem:[#allocation0]]
  $region66: #{tpu_custom_call.1} parent=0
    _
  %s10 = ssub.s32 1, %s8
  %s11 = scalar_select 0, %s10, %s8
  $region1: #{tpu_custom_call.1} parent=0
    #allocation2 [shape = 'u8[3072]{0}', space=vmem, size = 0xc00, scoped, tag = 'input window, operand 0, single buffered']
    #allocation3 [shape = 's32[1]{0}', space=sflag, size = 0x4, scoped, tag = 'scoped memory for tpu_custom_call.1']
    #allocation4 [shape = 's32[1]{0}', space=sflag, size = 0x4, scoped, tag = 'scoped memory for tpu_custom_call.1']
    #allocation5 [shape = 'u8[786432]{0}', space=vmem, size = 0xc0000, scoped, tag = 'input window, operand 1, single buffered']
    #allocation6 [shape = 's32[1]{0}', space=sflag, size = 0x4, scoped, tag = 'scoped memory for tpu_custom_call.1']
    #allocation7 [shape = 'u8[2048]{0}', space=vmem, size = 0x800, scoped, tag = 'input window, operand 2, single buffered']
    #allocation8 [shape = 'u8[262144]{0}', space=vmem, size = 0x40000, scoped, tag = 'input window, operand 3, single buffered']
    #allocation9 [shape = 's32[1]{0}', space=sflag, size = 0x4, scoped, tag = 'scoped memory for tpu_custom_call.1']
    #allocation10 [shape = 'u8[1024]{0}', space=vmem, size = 0x400, scoped, tag = 'input window, operand 4, single buffered']
    #allocation11 [shape = 'u8[65536]{0}', space=vmem, size = 0x10000, scoped, tag = 'input window, operand 5, single buffered']
    #allocation12 [shape = 's32[1]{0}', space=sflag, size = 0x4, scoped, tag = 'scoped memory for tpu_custom_call.1']
    #allocation13 [shape = 'u8[512]{0}', space=vmem, size = 0x400, scoped, tag = 'input window, operand 6, single buffered']
    #allocation14 [shape = 'u8[512]{0}', space=vmem, size = 0x400, scoped, tag = 'output window, operand 0, single buffered']
    %12 = vsyncpa [#allocation3], 0
    %13 = vsyncpa [#allocation6], 0
    %14 = vsyncpa [#allocation9], 0
    %15 = vsyncpa [#allocation12], 0
    %16 = vsyncpa [#allocation4], 0
    // Predicated region
    $region2: #{tpu_custom_call.1} parent=1 // pred_check
      _
    $region3: #{tpu_custom_call.1} parent=1 // pred_check_branch
      %18 = sbr.rel (0) target = $region5
    $region4: #{tpu_custom_call.1} parent=1 // pred_region
      %s20 = ssub.s32 96, 96
      %21 = vsyncadd [#allocation3], %s20
      %s23 = sshll.u32 [#allocation2], 4
      %s24 = int_to_ptr.vmem [resolvable:$true] %s23
      %26 = dma.hbm_to_vmem [thread:$0]  %s0, 96, %s24, [#allocation3]
    $region5: #{tpu_custom_call.1} parent=1 // pred_fallthru
      _
    // Predicated region
    $region6: #{tpu_custom_call.1} parent=1 // pred_check
      _
    $region7: #{tpu_custom_call.1} parent=1 // pred_check_branch
      %28 = sbr.rel (0) target = $region9
    $region8: #{tpu_custom_call.1} parent=1 // pred_region
      %s30 = ssub.s32 24576, 24576
      %31 = vsyncadd [#allocation6], %s30
      %s32 = sshll.u32 [#allocation5], 4
      %s33 = int_to_ptr.vmem [resolvable:$true] %s32
      %38 = dma.hbm_to_vmem [thread:$0]  %s1, 24576, %s33, [#allocation6], 256, 256, 16
    $region9: #{tpu_custom_call.1} parent=1 // pred_fallthru
      _
    // Predicated region
    $region10: #{tpu_custom_call.1} parent=1 // pred_check
      _
    $region11: #{tpu_custom_call.1} parent=1 // pred_check_branch
      %40 = sbr.rel (0) target = $region13
    $region12: #{tpu_custom_call.1} parent=1 // pred_region
      %s42 = ssub.s32 64, 64
      %43 = vsyncadd [#allocation6], %s42
      %s45 = sshll.u32 [#allocation7], 4
      %s46 = int_to_ptr.vmem [resolvable:$true] %s45
      %48 = dma.hbm_to_vmem [thread:$0]  %s2, 64, %s46, [#allocation6]
    $region13: #{tpu_custom_call.1} parent=1 // pred_fallthru
      _
    // Predicated region
    $region14: #{tpu_custom_call.1} parent=1 // pred_check
      _
    $region15: #{tpu_custom_call.1} parent=1 // pred_check_branch
      %50 = sbr.rel (0) target = $region17
    $region16: #{tpu_custom_call.1} parent=1 // pred_region
      %s52 = ssub.s32 8192, 8192
      %53 = vsyncadd [#allocation9], %s52
      %s54 = sshll.u32 [#allocation8], 4
      %s55 = int_to_ptr.vmem [resolvable:$true] %s54
      %60 = dma.hbm_to_vmem [thread:$0]  %s3, 8192, %s55, [#allocation9], 128, 128, 8
    $region17: #{tpu_custom_call.1} parent=1 // pred_fallthru
      _
    // Predicated region
    $region18: #{tpu_custom_call.1} parent=1 // pred_check
      _
    $region19: #{tpu_custom_call.1} parent=1 // pred_check_branch
      %62 = sbr.rel (0) target = $region21
    $region20: #{tpu_custom_call.1} parent=1 // pred_region
      %s64 = ssub.s32 32, 32
      %65 = vsyncadd [#allocation9], %s64
      %s67 = sshll.u32 [#allocation10], 4
      %s68 = int_to_ptr.vmem [resolvable:$true] %s67
      %70 = dma.hbm_to_vmem [thread:$0]  %s4, 32, %s68, [#allocation9]
    $region21: #{tpu_custom_call.1} parent=1 // pred_fallthru
      _
    // Predicated region
    $region22: #{tpu_custom_call.1} parent=1 // pred_check
      _
    $region23: #{tpu_custom_call.1} parent=1 // pred_check_branch
      %72 = sbr.rel (0) target = $region25
    $region24: #{tpu_custom_call.1} parent=1 // pred_region
      %s74 = ssub.s32 2048, 2048
      %75 = vsyncadd [#allocation12], %s74
      %s76 = sshll.u32 [#allocation11], 4
      %s77 = int_to_ptr.vmem [resolvable:$true] %s76
      %82 = dma.hbm_to_vmem [thread:$0]  %s5, 2048, %s77, [#allocation12], 64, 64, 4
    $region25: #{tpu_custom_call.1} parent=1 // pred_fallthru
      _
    // Predicated region
    $region26: #{tpu_custom_call.1} parent=1 // pred_check
      _
    $region27: #{tpu_custom_call.1} parent=1 // pred_check_branch
      %84 = sbr.rel (0) target = $region29
    $region28: #{tpu_custom_call.1} parent=1 // pred_region
      %s86 = ssub.s32 16, 16
      %87 = vsyncadd [#allocation12], %s86
      %s89 = sshll.u32 [#allocation13], 4
      %s90 = int_to_ptr.vmem [resolvable:$true] %s89
      %92 = dma.hbm_to_vmem [thread:$0]  %s6, 16, %s90, [#allocation12]
    $region29: #{tpu_custom_call.1} parent=1 // pred_fallthru
      _
    // Predicated region
    $region30: #{tpu_custom_call.1} parent=1 // pred_check
      _
    $region31: #{tpu_custom_call.1} parent=1 // pred_check_branch
      %94 = sbr.rel (0) target = $region33
    $region32: #{tpu_custom_call.1} parent=1 // pred_region
      %95 = dma.done [#allocation3], 96
    $region33: #{tpu_custom_call.1} parent=1 // pred_fallthru
      _
    // Predicated region
    $region34: #{tpu_custom_call.1} parent=1 // pred_check
      _
    $region35: #{tpu_custom_call.1} parent=1 // pred_check_branch
      %97 = sbr.rel (0) target = $region37
    $region36: #{tpu_custom_call.1} parent=1 // pred_region
      %98 = dma.done [#allocation6], 24576
    $region37: #{tpu_custom_call.1} parent=1 // pred_fallthru
      _
    // Predicated region
    $region38: #{tpu_custom_call.1} parent=1 // pred_check
      _
    $region39: #{tpu_custom_call.1} parent=1 // pred_check_branch
      %100 = sbr.rel (0) target = $region41
    $region40: #{tpu_custom_call.1} parent=1 // pred_region
      %101 = dma.done [#allocation6], 64
    $region41: #{tpu_custom_call.1} parent=1 // pred_fallthru
      _
    // Predicated region
    $region42: #{tpu_custom_call.1} parent=1 // pred_check
      _
    $region43: #{tpu_custom_call.1} parent=1 // pred_check_branch
      %103 = sbr.rel (0) target = $region45
    $region44: #{tpu_custom_call.1} parent=1 // pred_region
      %104 = dma.done [#allocation9], 8192
    $region45: #{tpu_custom_call.1} parent=1 // pred_fallthru
      _
    // Predicated region
    $region46: #{tpu_custom_call.1} parent=1 // pred_check
      _
    $region47: #{tpu_custom_call.1} parent=1 // pred_check_branch
      %106 = sbr.rel (0) target = $region49
    $region48: #{tpu_custom_call.1} parent=1 // pred_region
      %107 = dma.done [#allocation9], 32
    $region49: #{tpu_custom_call.1} parent=1 // pred_fallthru
      _
    // Predicated region
    $region50: #{tpu_custom_call.1} parent=1 // pred_check
      _
    $region51: #{tpu_custom_call.1} parent=1 // pred_check_branch
      %109 = sbr.rel (0) target = $region53
    $region52: #{tpu_custom_call.1} parent=1 // pred_region
      %110 = dma.done [#allocation12], 2048
    $region53: #{tpu_custom_call.1} parent=1 // pred_fallthru
      _
    // Predicated region
    $region54: #{tpu_custom_call.1} parent=1 // pred_check
      _
    $region55: #{tpu_custom_call.1} parent=1 // pred_check_branch
      %112 = sbr.rel (0) target = $region57
    $region56: #{tpu_custom_call.1} parent=1 // pred_region
      %113 = dma.done [#allocation12], 16
    $region57: #{tpu_custom_call.1} parent=1 // pred_fallthru
      _
    %v115 = vld [vmem:[#allocation2] sm:$0x3f]
    %v116 = vld [vmem:[#allocation5] sm:$0xff]
    %v117 = vld [vmem:[#allocation5 + $0x8] sm:$0xff]
    %v118 = vld [vmem:[#allocation5 + $0x10] sm:$0xff]
    %v119 = vld [vmem:[#allocation5 + $0x18] sm:$0xff]
    %v120 = vld [vmem:[#allocation5 + $0x20] sm:$0xff]
    %v121 = vld [vmem:[#allocation5 + $0x28] sm:$0xff]
    %v122 = vld [vmem:[#allocation5 + $0x30] sm:$0xff]
    %v123 = vld [vmem:[#allocation5 + $0x38] sm:$0xff]
    %v124 = vld [vmem:[#allocation5 + $0x40] sm:$0xff]
    %v125 = vld [vmem:[#allocation5 + $0x48] sm:$0xff]
    %v126 = vld [vmem:[#allocation5 + $0x50] sm:$0xff]
    %v127 = vld [vmem:[#allocation5 + $0x58] sm:$0xff]
    %v128 = vld [vmem:[#allocation5 + $0x60] sm:$0xff]
    %v129 = vld [vmem:[#allocation5 + $0x68] sm:$0xff]
    %v130 = vld [vmem:[#allocation5 + $0x70] sm:$0xff]
    %v131 = vld [vmem:[#allocation5 + $0x78] sm:$0xff]
    %v132 = vld [vmem:[#allocation5 + $0x80] sm:$0xff]
    %v133 = vld [vmem:[#allocation5 + $0x88] sm:$0xff]
    %v134 = vld [vmem:[#allocation5 + $0x90] sm:$0xff]
    %v135 = vld [vmem:[#allocation5 + $0x98] sm:$0xff]
    %v136 = vld [vmem:[#allocation5 + $0xa0] sm:$0xff]
    %v137 = vld [vmem:[#allocation5 + $0xa8] sm:$0xff]
    %v138 = vld [vmem:[#allocation5 + $0xb0] sm:$0xff]
    %v139 = vld [vmem:[#allocation5 + $0xb8] sm:$0xff]
    %v140 = vld [vmem:[#allocation5 + $0xc0] sm:$0xff]
    %v141 = vld [vmem:[#allocation5 + $0xc8] sm:$0xff]
    %v142 = vld [vmem:[#allocation5 + $0xd0] sm:$0xff]
    %v143 = vld [vmem:[#allocation5 + $0xd8] sm:$0xff]
    %v144 = vld [vmem:[#allocation5 + $0xe0] sm:$0xff]
    %v145 = vld [vmem:[#allocation5 + $0xe8] sm:$0xff]
    %v146 = vld [vmem:[#allocation5 + $0xf0] sm:$0xff]
    %v147 = vld [vmem:[#allocation5 + $0xf8] sm:$0xff]
    %v148 = vld [vmem:[#allocation5 + $0x100] sm:$0xff]
    %v149 = vld [vmem:[#allocation5 + $0x108] sm:$0xff]
    %v150 = vld [vmem:[#allocation5 + $0x110] sm:$0xff]
    %v151 = vld [vmem:[#allocation5 + $0x118] sm:$0xff]
    %v152 = vld [vmem:[#allocation5 + $0x120] sm:$0xff]
    %v153 = vld [vmem:[#allocation5 + $0x128] sm:$0xff]
    %v154 = vld [vmem:[#allocation5 + $0x130] sm:$0xff]
    %v155 = vld [vmem:[#allocation5 + $0x138] sm:$0xff]
    %v156 = vld [vmem:[#allocation5 + $0x140] sm:$0xff]
    %v157 = vld [vmem:[#allocation5 + $0x148] sm:$0xff]
    %v158 = vld [vmem:[#allocation5 + $0x150] sm:$0xff]
    %v159 = vld [vmem:[#allocation5 + $0x158] sm:$0xff]
    %v160 = vld [vmem:[#allocation5 + $0x160] sm:$0xff]
    %v161 = vld [vmem:[#allocation5 + $0x168] sm:$0xff]
    %v162 = vld [vmem:[#allocation5 + $0x170] sm:$0xff]
    %v163 = vld [vmem:[#allocation5 + $0x178] sm:$0xff]
    %v164 = vld [vmem:[#allocation5 + $0x180] sm:$0xff]
    %v165 = vld [vmem:[#allocation5 + $0x188] sm:$0xff]
    %v166 = vld [vmem:[#allocation5 + $0x190] sm:$0xff]
    %v167 = vld [vmem:[#allocation5 + $0x198] sm:$0xff]
    %v168 = vld [vmem:[#allocation5 + $0x1a0] sm:$0xff]
    %v169 = vld [vmem:[#allocation5 + $0x1a8] sm:$0xff]
    %v170 = vld [vmem:[#allocation5 + $0x1b0] sm:$0xff]
    %v171 = vld [vmem:[#allocation5 + $0x1b8] sm:$0xff]
    %v172 = vld [vmem:[#allocation5 + $0x1c0] sm:$0xff]
    %v173 = vld [vmem:[#allocation5 + $0x1c8] sm:$0xff]
    %v174 = vld [vmem:[#allocation5 + $0x1d0] sm:$0xff]
    %v175 = vld [vmem:[#allocation5 + $0x1d8] sm:$0xff]
    %v176 = vld [vmem:[#allocation5 + $0x1e0] sm:$0xff]
    %v177 = vld [vmem:[#allocation5 + $0x1e8] sm:$0xff]
    %v178 = vld [vmem:[#allocation5 + $0x1f0] sm:$0xff]
    %v179 = vld [vmem:[#allocation5 + $0x1f8] sm:$0xff]
    %v180 = vld [vmem:[#allocation5 + $0x200] sm:$0xff]
    %v181 = vld [vmem:[#allocation5 + $0x208] sm:$0xff]
    %v182 = vld [vmem:[#allocation5 + $0x210] sm:$0xff]
    %v183 = vld [vmem:[#allocation5 + $0x218] sm:$0xff]
    %v184 = vld [vmem:[#allocation5 + $0x220] sm:$0xff]
    %v185 = vld [vmem:[#allocation5 + $0x228] sm:$0xff]
    %v186 = vld [vmem:[#allocation5 + $0x230] sm:$0xff]
    %v187 = vld [vmem:[#allocation5 + $0x238] sm:$0xff]
    %v188 = vld [vmem:[#allocation5 + $0x240] sm:$0xff]
    %v189 = vld [vmem:[#allocation5 + $0x248] sm:$0xff]
    %v190 = vld [vmem:[#allocation5 + $0x250] sm:$0xff]
    %v191 = vld [vmem:[#allocation5 + $0x258] sm:$0xff]
    %v192 = vld [vmem:[#allocation5 + $0x260] sm:$0xff]
    %v193 = vld [vmem:[#allocation5 + $0x268] sm:$0xff]
    %v194 = vld [vmem:[#allocation5 + $0x270] sm:$0xff]
    %v195 = vld [vmem:[#allocation5 + $0x278] sm:$0xff]
    %v196 = vld [vmem:[#allocation5 + $0x280] sm:$0xff]
    %v197 = vld [vmem:[#allocation5 + $0x288] sm:$0xff]
    %v198 = vld [vmem:[#allocation5 + $0x290] sm:$0xff]
    %v199 = vld [vmem:[#allocation5 + $0x298] sm:$0xff]
    %v200 = vld [vmem:[#allocation5 + $0x2a0] sm:$0xff]
    %v201 = vld [vmem:[#allocation5 + $0x2a8] sm:$0xff]
    %v202 = vld [vmem:[#allocation5 + $0x2b0] sm:$0xff]
    %v203 = vld [vmem:[#allocation5 + $0x2b8] sm:$0xff]
    %v204 = vld [vmem:[#allocation5 + $0x2c0] sm:$0xff]
    %v205 = vld [vmem:[#allocation5 + $0x2c8] sm:$0xff]
    %v206 = vld [vmem:[#allocation5 + $0x2d0] sm:$0xff]
    %v207 = vld [vmem:[#allocation5 + $0x2d8] sm:$0xff]
    %v208 = vld [vmem:[#allocation5 + $0x2e0] sm:$0xff]
    %v209 = vld [vmem:[#allocation5 + $0x2e8] sm:$0xff]
    %v210 = vld [vmem:[#allocation5 + $0x2f0] sm:$0xff]
    %v211 = vld [vmem:[#allocation5 + $0x2f8] sm:$0xff]
    %v212 = vld [vmem:[#allocation5 + $0x300] sm:$0xff]
    %v213 = vld [vmem:[#allocation5 + $0x308] sm:$0xff]
    %v214 = vld [vmem:[#allocation5 + $0x310] sm:$0xff]
    %v215 = vld [vmem:[#allocation5 + $0x318] sm:$0xff]
    %v216 = vld [vmem:[#allocation5 + $0x320] sm:$0xff]
    %v217 = vld [vmem:[#allocation5 + $0x328] sm:$0xff]
    %v218 = vld [vmem:[#allocation5 + $0x330] sm:$0xff]
    %v219 = vld [vmem:[#allocation5 + $0x338] sm:$0xff]
    %v220 = vld [vmem:[#allocation5 + $0x340] sm:$0xff]
    %v221 = vld [vmem:[#allocation5 + $0x348] sm:$0xff]
    %v222 = vld [vmem:[#allocation5 + $0x350] sm:$0xff]
    %v223 = vld [vmem:[#allocation5 + $0x358] sm:$0xff]
    %v224 = vld [vmem:[#allocation5 + $0x360] sm:$0xff]
    %v225 = vld [vmem:[#allocation5 + $0x368] sm:$0xff]
    %v226 = vld [vmem:[#allocation5 + $0x370] sm:$0xff]
    %v227 = vld [vmem:[#allocation5 + $0x378] sm:$0xff]
    %v228 = vld [vmem:[#allocation5 + $0x380] sm:$0xff]
    %v229 = vld [vmem:[#allocation5 + $0x388] sm:$0xff]
    %v230 = vld [vmem:[#allocation5 + $0x390] sm:$0xff]
    %v231 = vld [vmem:[#allocation5 + $0x398] sm:$0xff]
    %v232 = vld [vmem:[#allocation5 + $0x3a0] sm:$0xff]
    %v233 = vld [vmem:[#allocation5 + $0x3a8] sm:$0xff]
    %v234 = vld [vmem:[#allocation5 + $0x3b0] sm:$0xff]
    %v235 = vld [vmem:[#allocation5 + $0x3b8] sm:$0xff]
    %v236 = vld [vmem:[#allocation5 + $0x3c0] sm:$0xff]
    %v237 = vld [vmem:[#allocation5 + $0x3c8] sm:$0xff]
    %v238 = vld [vmem:[#allocation5 + $0x3d0] sm:$0xff]
    %v239 = vld [vmem:[#allocation5 + $0x3d8] sm:$0xff]
    %v240 = vld [vmem:[#allocation5 + $0x3e0] sm:$0xff]
    %v241 = vld [vmem:[#allocation5 + $0x3e8] sm:$0xff]
    %v242 = vld [vmem:[#allocation5 + $0x3f0] sm:$0xff]
    %v243 = vld [vmem:[#allocation5 + $0x3f8] sm:$0xff]
    %v244 = vld [vmem:[#allocation5 + $0x400] sm:$0xff]
    %v245 = vld [vmem:[#allocation5 + $0x408] sm:$0xff]
    %v246 = vld [vmem:[#allocation5 + $0x410] sm:$0xff]
    %v247 = vld [vmem:[#allocation5 + $0x418] sm:$0xff]
    %v248 = vld [vmem:[#allocation5 + $0x420] sm:$0xff]
    %v249 = vld [vmem:[#allocation5 + $0x428] sm:$0xff]
    %v250 = vld [vmem:[#allocation5 + $0x430] sm:$0xff]
    %v251 = vld [vmem:[#allocation5 + $0x438] sm:$0xff]
    %v252 = vld [vmem:[#allocation5 + $0x440] sm:$0xff]
    %v253 = vld [vmem:[#allocation5 + $0x448] sm:$0xff]
    %v254 = vld [vmem:[#allocation5 + $0x450] sm:$0xff]
    %v255 = vld [vmem:[#allocation5 + $0x458] sm:$0xff]
    %v256 = vld [vmem:[#allocation5 + $0x460] sm:$0xff]
    %v257 = vld [vmem:[#allocation5 + $0x468] sm:$0xff]
    %v258 = vld [vmem:[#allocation5 + $0x470] sm:$0xff]
    %v259 = vld [vmem:[#allocation5 + $0x478] sm:$0xff]
    %v260 = vld [vmem:[#allocation5 + $0x480] sm:$0xff]
    %v261 = vld [vmem:[#allocation5 + $0x488] sm:$0xff]
    %v262 = vld [vmem:[#allocation5 + $0x490] sm:$0xff]
    %v263 = vld [vmem:[#allocation5 + $0x498] sm:$0xff]
    %v264 = vld [vmem:[#allocation5 + $0x4a0] sm:$0xff]
    %v265 = vld [vmem:[#allocation5 + $0x4a8] sm:$0xff]
    %v266 = vld [vmem:[#allocation5 + $0x4b0] sm:$0xff]
    %v267 = vld [vmem:[#allocation5 + $0x4b8] sm:$0xff]
    %v268 = vld [vmem:[#allocation5 + $0x4c0] sm:$0xff]
    %v269 = vld [vmem:[#allocation5 + $0x4c8] sm:$0xff]
    %v270 = vld [vmem:[#allocation5 + $0x4d0] sm:$0xff]
    %v271 = vld [vmem:[#allocation5 + $0x4d8] sm:$0xff]
    %v272 = vld [vmem:[#allocation5 + $0x4e0] sm:$0xff]
    %v273 = vld [vmem:[#allocation5 + $0x4e8] sm:$0xff]
    %v274 = vld [vmem:[#allocation5 + $0x4f0] sm:$0xff]
    %v275 = vld [vmem:[#allocation5 + $0x4f8] sm:$0xff]
    %v276 = vld [vmem:[#allocation5 + $0x500] sm:$0xff]
    %v277 = vld [vmem:[#allocation5 + $0x508] sm:$0xff]
    %v278 = vld [vmem:[#allocation5 + $0x510] sm:$0xff]
    %v279 = vld [vmem:[#allocation5 + $0x518] sm:$0xff]
    %v280 = vld [vmem:[#allocation5 + $0x520] sm:$0xff]
    %v281 = vld [vmem:[#allocation5 + $0x528] sm:$0xff]
    %v282 = vld [vmem:[#allocation5 + $0x530] sm:$0xff]
    %v283 = vld [vmem:[#allocation5 + $0x538] sm:$0xff]
    %v284 = vld [vmem:[#allocation5 + $0x540] sm:$0xff]
    %v285 = vld [vmem:[#allocation5 + $0x548] sm:$0xff]
    %v286 = vld [vmem:[#allocation5 + $0x550] sm:$0xff]
    %v287 = vld [vmem:[#allocation5 + $0x558] sm:$0xff]
    %v288 = vld [vmem:[#allocation5 + $0x560] sm:$0xff]
    %v289 = vld [vmem:[#allocation5 + $0x568] sm:$0xff]
    %v290 = vld [vmem:[#allocation5 + $0x570] sm:$0xff]
    %v291 = vld [vmem:[#allocation5 + $0x578] sm:$0xff]
    %v292 = vld [vmem:[#allocation5 + $0x580] sm:$0xff]
    %v293 = vld [vmem:[#allocation5 + $0x588] sm:$0xff]
    %v294 = vld [vmem:[#allocation5 + $0x590] sm:$0xff]
    %v295 = vld [vmem:[#allocation5 + $0x598] sm:$0xff]
    %v296 = vld [vmem:[#allocation5 + $0x5a0] sm:$0xff]
    %v297 = vld [vmem:[#allocation5 + $0x5a8] sm:$0xff]
    %v298 = vld [vmem:[#allocation5 + $0x5b0] sm:$0xff]
    %v299 = vld [vmem:[#allocation5 + $0x5b8] sm:$0xff]
    %v300 = vld [vmem:[#allocation5 + $0x5c0] sm:$0xff]
    %v301 = vld [vmem:[#allocation5 + $0x5c8] sm:$0xff]
    %v302 = vld [vmem:[#allocation5 + $0x5d0] sm:$0xff]
    %v303 = vld [vmem:[#allocation5 + $0x5d8] sm:$0xff]
    %v304 = vld [vmem:[#allocation5 + $0x5e0] sm:$0xff]
    %v305 = vld [vmem:[#allocation5 + $0x5e8] sm:$0xff]
    %v306 = vld [vmem:[#allocation5 + $0x5f0] sm:$0xff]
    %v307 = vld [vmem:[#allocation5 + $0x5f8] sm:$0xff]
    %v308 = vld [vmem:[#allocation7] sm:$0xf]
    %v310 = vlaneseq
    %v311 = vshrl.u32 %v310, 7
    %v312 = vsub.s32 0, %v311
    %v313 = vrot.slane %v308, %v312
    %v314 = vlaneseq
    %v315 = vshrl.u32 %v314, 7
    %v316 = vsub.s32 1, %v315
    %v317 = vrot.slane %v308, %v316
    %v318 = vlaneseq
    %v319 = vshrl.u32 %v318, 7
    %v320 = vsub.s32 2, %v319
    %v321 = vrot.slane %v308, %v320
    %v322 = vlaneseq
    %v323 = vshrl.u32 %v322, 7
    %v324 = vsub.s32 3, %v323
    %v325 = vrot.slane %v308, %v324
    %v331 = vcombine.high %v115, %v115
    %v333 = vunpack.c.l.s4 1966171168
    %v334 = vunpack.c.0.s8 %v333
    %v335 = vlaneseq
    %v336 = vshrl.u32 %v335, 7
    %v337 = vsub.s32 %v334, %v336
    %v338 = vrot.slane %v115, %v337
    %v340 = vunpack.c.l.s4 1966171168
    %v341 = vunpack.c.0.s8 %v340
    %v342 = vlaneseq
    %v343 = vshrl.u32 %v342, 7
    %v344 = vsub.s32 %v341, %v343
    %v345 = vrot.slane %v331, %v344
    %v346 = vcombine.high %v338, %v338
    %v347 = vcombine.high %v345, %v345
    %v349 = vunpack.c.l.s4 1966171168
    %v350 = vunpack.c.0.s8 %v349
    %v351 = vlaneseq
    %v352 = vshrl.u32 %v351, 7
    %v353 = vsub.s32 %v350, %v352
    %v354 = vrot.slane %v338, %v353
    %v356 = vunpack.c.l.s4 1966171168
    %v357 = vunpack.c.0.s8 %v356
    %v358 = vlaneseq
    %v359 = vshrl.u32 %v358, 7
    %v360 = vsub.s32 %v357, %v359
    %v361 = vrot.slane %v345, %v360
    %v363 = vunpack.c.l.s4 1966171168
    %v364 = vunpack.c.0.s8 %v363
    %v365 = vlaneseq
    %v366 = vshrl.u32 %v365, 7
    %v367 = vsub.s32 %v364, %v366
    %v368 = vrot.slane %v346, %v367
    %v370 = vunpack.c.l.s4 1966171168
    %v371 = vunpack.c.0.s8 %v370
    %v372 = vlaneseq
    %v373 = vshrl.u32 %v372, 7
    %v374 = vsub.s32 %v371, %v373
    %v375 = vrot.slane %v347, %v374
    %v376 = vcombine.high %v354, %v354
    %v377 = vcombine.high %v368, %v368
    %v576 = vunpack.c.l.b16 %v116
    %v577 = vunpack.c.h.b16 %v116
    %v578 = vunpack.c.l.b16 %v117
    %v579 = vunpack.c.h.b16 %v117
    %v580 = vunpack.c.l.b16 %v118
    %v581 = vunpack.c.h.b16 %v118
    %v582 = vunpack.c.l.b16 %v119
    %v583 = vunpack.c.h.b16 %v119
    %v584 = vunpack.c.l.b16 %v120
    %v585 = vunpack.c.h.b16 %v120
    %v586 = vunpack.c.l.b16 %v121
    %v587 = vunpack.c.h.b16 %v121
    %v588 = vunpack.c.l.b16 %v122
    %v589 = vunpack.c.h.b16 %v122
    %v590 = vunpack.c.l.b16 %v123
    %v591 = vunpack.c.h.b16 %v123
    %v592 = vunpack.c.l.b16 %v124
    %v593 = vunpack.c.h.b16 %v124
    %v594 = vunpack.c.l.b16 %v125
    %v595 = vunpack.c.h.b16 %v125
    %v596 = vunpack.c.l.b16 %v126
    %v597 = vunpack.c.h.b16 %v126
    %v598 = vunpack.c.l.b16 %v127
    %v599 = vunpack.c.h.b16 %v127
    %v600 = vunpack.c.l.b16 %v128
    %v601 = vunpack.c.h.b16 %v128
    %v602 = vunpack.c.l.b16 %v129
    %v603 = vunpack.c.h.b16 %v129
    %v604 = vunpack.c.l.b16 %v130
    %v605 = vunpack.c.h.b16 %v130
    %v606 = vunpack.c.l.b16 %v131
    %v607 = vunpack.c.h.b16 %v131
    %v608 = vunpack.c.l.b16 %v132
    %v609 = vunpack.c.h.b16 %v132
    %v610 = vunpack.c.l.b16 %v133
    %v611 = vunpack.c.h.b16 %v133
    %v612 = vunpack.c.l.b16 %v134
    %v613 = vunpack.c.h.b16 %v134
    %v614 = vunpack.c.l.b16 %v135
    %v615 = vunpack.c.h.b16 %v135
    %v616 = vunpack.c.l.b16 %v136
    %v617 = vunpack.c.h.b16 %v136
    %v618 = vunpack.c.l.b16 %v137
    %v619 = vunpack.c.h.b16 %v137
    %v620 = vunpack.c.l.b16 %v138
    %v621 = vunpack.c.h.b16 %v138
    %v622 = vunpack.c.l.b16 %v139
    %v623 = vunpack.c.h.b16 %v139
    %v624 = vunpack.c.l.b16 %v140
    %v625 = vunpack.c.h.b16 %v140
    %v626 = vunpack.c.l.b16 %v141
    %v627 = vunpack.c.h.b16 %v141
    %v628 = vunpack.c.l.b16 %v142
    %v629 = vunpack.c.h.b16 %v142
    %v630 = vunpack.c.l.b16 %v143
    %v631 = vunpack.c.h.b16 %v143
    %v632 = vunpack.c.l.b16 %v144
    %v633 = vunpack.c.h.b16 %v144
    %v634 = vunpack.c.l.b16 %v145
    %v635 = vunpack.c.h.b16 %v145
    %v636 = vunpack.c.l.b16 %v146
    %v637 = vunpack.c.h.b16 %v146
    %v638 = vunpack.c.l.b16 %v147
    %v639 = vunpack.c.h.b16 %v147
    %v640 = vunpack.c.l.b16 %v148
    %v641 = vunpack.c.h.b16 %v148
    %v642 = vunpack.c.l.b16 %v149
    %v643 = vunpack.c.h.b16 %v149
    %v644 = vunpack.c.l.b16 %v150
    %v645 = vunpack.c.h.b16 %v150
    %v646 = vunpack.c.l.b16 %v151
    %v647 = vunpack.c.h.b16 %v151
    %v648 = vunpack.c.l.b16 %v152
    %v649 = vunpack.c.h.b16 %v152
    %v650 = vunpack.c.l.b16 %v153
    %v651 = vunpack.c.h.b16 %v153
    %v652 = vunpack.c.l.b16 %v154
    %v653 = vunpack.c.h.b16 %v154
    %v654 = vunpack.c.l.b16 %v155
    %v655 = vunpack.c.h.b16 %v155
    %v656 = vunpack.c.l.b16 %v156
    %v657 = vunpack.c.h.b16 %v156
    %v658 = vunpack.c.l.b16 %v157
    %v659 = vunpack.c.h.b16 %v157
    %v660 = vunpack.c.l.b16 %v158
    %v661 = vunpack.c.h.b16 %v158
    %v662 = vunpack.c.l.b16 %v159
    %v663 = vunpack.c.h.b16 %v159
    %v664 = vunpack.c.l.b16 %v160
    %v665 = vunpack.c.h.b16 %v160
    %v666 = vunpack.c.l.b16 %v161
    %v667 = vunpack.c.h.b16 %v161
    %v668 = vunpack.c.l.b16 %v162
    %v669 = vunpack.c.h.b16 %v162
    %v670 = vunpack.c.l.b16 %v163
    %v671 = vunpack.c.h.b16 %v163
    %v672 = vunpack.c.l.b16 %v164
    %v673 = vunpack.c.h.b16 %v164
    %v674 = vunpack.c.l.b16 %v165
    %v675 = vunpack.c.h.b16 %v165
    %v676 = vunpack.c.l.b16 %v166
    %v677 = vunpack.c.h.b16 %v166
    %v678 = vunpack.c.l.b16 %v167
    %v679 = vunpack.c.h.b16 %v167
    %v680 = vunpack.c.l.b16 %v168
    %v681 = vunpack.c.h.b16 %v168
    %v682 = vunpack.c.l.b16 %v169
    %v683 = vunpack.c.h.b16 %v169
    %v684 = vunpack.c.l.b16 %v170
    %v685 = vunpack.c.h.b16 %v170
    %v686 = vunpack.c.l.b16 %v171
    %v687 = vunpack.c.h.b16 %v171
    %v688 = vunpack.c.l.b16 %v172
    %v689 = vunpack.c.h.b16 %v172
    %v690 = vunpack.c.l.b16 %v173
    %v691 = vunpack.c.h.b16 %v173
    %v692 = vunpack.c.l.b16 %v174
    %v693 = vunpack.c.h.b16 %v174
    %v694 = vunpack.c.l.b16 %v175
    %v695 = vunpack.c.h.b16 %v175
    %v696 = vunpack.c.l.b16 %v176
    %v697 = vunpack.c.h.b16 %v176
    %v698 = vunpack.c.l.b16 %v177
    %v699 = vunpack.c.h.b16 %v177
    %v700 = vunpack.c.l.b16 %v178
    %v701 = vunpack.c.h.b16 %v178
    %v702 = vunpack.c.l.b16 %v179
    %v703 = vunpack.c.h.b16 %v179
    %v704 = vunpack.c.l.b16 %v180
    %v705 = vunpack.c.h.b16 %v180
    %v706 = vunpack.c.l.b16 %v181
    %v707 = vunpack.c.h.b16 %v181
    %v708 = vunpack.c.l.b16 %v182
    %v709 = vunpack.c.h.b16 %v182
    %v710 = vunpack.c.l.b16 %v183
    %v711 = vunpack.c.h.b16 %v183
    %v712 = vunpack.c.l.b16 %v184
    %v713 = vunpack.c.h.b16 %v184
    %v714 = vunpack.c.l.b16 %v185
    %v715 = vunpack.c.h.b16 %v185
    %v716 = vunpack.c.l.b16 %v186
    %v717 = vunpack.c.h.b16 %v186
    %v718 = vunpack.c.l.b16 %v187
    %v719 = vunpack.c.h.b16 %v187
    %v720 = vunpack.c.l.b16 %v188
    %v721 = vunpack.c.h.b16 %v188
    %v722 = vunpack.c.l.b16 %v189
    %v723 = vunpack.c.h.b16 %v189
    %v724 = vunpack.c.l.b16 %v190
    %v725 = vunpack.c.h.b16 %v190
    %v726 = vunpack.c.l.b16 %v191
    %v727 = vunpack.c.h.b16 %v191
    %v728 = vunpack.c.l.b16 %v192
    %v729 = vunpack.c.h.b16 %v192
    %v730 = vunpack.c.l.b16 %v193
    %v731 = vunpack.c.h.b16 %v193
    %v732 = vunpack.c.l.b16 %v194
    %v733 = vunpack.c.h.b16 %v194
    %v734 = vunpack.c.l.b16 %v195
    %v735 = vunpack.c.h.b16 %v195
    %v736 = vunpack.c.l.b16 %v196
    %v737 = vunpack.c.h.b16 %v196
    %v738 = vunpack.c.l.b16 %v197
    %v739 = vunpack.c.h.b16 %v197
    %v740 = vunpack.c.l.b16 %v198
    %v741 = vunpack.c.h.b16 %v198
    %v742 = vunpack.c.l.b16 %v199
    %v743 = vunpack.c.h.b16 %v199
    %v744 = vunpack.c.l.b16 %v200
    %v745 = vunpack.c.h.b16 %v200
    %v746 = vunpack.c.l.b16 %v201
    %v747 = vunpack.c.h.b16 %v201
    %v748 = vunpack.c.l.b16 %v202
    %v749 = vunpack.c.h.b16 %v202
    %v750 = vunpack.c.l.b16 %v203
    %v751 = vunpack.c.h.b16 %v203
    %v752 = vunpack.c.l.b16 %v204
    %v753 = vunpack.c.h.b16 %v204
    %v754 = vunpack.c.l.b16 %v205
    %v755 = vunpack.c.h.b16 %v205
    %v756 = vunpack.c.l.b16 %v206
    %v757 = vunpack.c.h.b16 %v206
    %v758 = vunpack.c.l.b16 %v207
    %v759 = vunpack.c.h.b16 %v207
    %v760 = vunpack.c.l.b16 %v208
    %v761 = vunpack.c.h.b16 %v208
    %v762 = vunpack.c.l.b16 %v209
    %v763 = vunpack.c.h.b16 %v209
    %v764 = vunpack.c.l.b16 %v210
    %v765 = vunpack.c.h.b16 %v210
    %v766 = vunpack.c.l.b16 %v211
    %v767 = vunpack.c.h.b16 %v211
    %v768 = vunpack.c.l.b16 %v212
    %v769 = vunpack.c.h.b16 %v212
    %v770 = vunpack.c.l.b16 %v213
    %v771 = vunpack.c.h.b16 %v213
    %v772 = vunpack.c.l.b16 %v214
    %v773 = vunpack.c.h.b16 %v214
    %v774 = vunpack.c.l.b16 %v215
    %v775 = vunpack.c.h.b16 %v215
    %v776 = vunpack.c.l.b16 %v216
    %v777 = vunpack.c.h.b16 %v216
    %v778 = vunpack.c.l.b16 %v217
    %v779 = vunpack.c.h.b16 %v217
    %v780 = vunpack.c.l.b16 %v218
    %v781 = vunpack.c.h.b16 %v218
    %v782 = vunpack.c.l.b16 %v219
    %v783 = vunpack.c.h.b16 %v219
    %v784 = vunpack.c.l.b16 %v220
    %v785 = vunpack.c.h.b16 %v220
    %v786 = vunpack.c.l.b16 %v221
    %v787 = vunpack.c.h.b16 %v221
    %v788 = vunpack.c.l.b16 %v222
    %v789 = vunpack.c.h.b16 %v222
    %v790 = vunpack.c.l.b16 %v223
    %v791 = vunpack.c.h.b16 %v223
    %v792 = vunpack.c.l.b16 %v224
    %v793 = vunpack.c.h.b16 %v224
    %v794 = vunpack.c.l.b16 %v225
    %v795 = vunpack.c.h.b16 %v225
    %v796 = vunpack.c.l.b16 %v226
    %v797 = vunpack.c.h.b16 %v226
    %v798 = vunpack.c.l.b16 %v227
    %v799 = vunpack.c.h.b16 %v227
    %v800 = vunpack.c.l.b16 %v228
    %v801 = vunpack.c.h.b16 %v228
    %v802 = vunpack.c.l.b16 %v229
    %v803 = vunpack.c.h.b16 %v229
    %v804 = vunpack.c.l.b16 %v230
    %v805 = vunpack.c.h.b16 %v230
    %v806 = vunpack.c.l.b16 %v231
    %v807 = vunpack.c.h.b16 %v231
    %v808 = vunpack.c.l.b16 %v232
    %v809 = vunpack.c.h.b16 %v232
    %v810 = vunpack.c.l.b16 %v233
    %v811 = vunpack.c.h.b16 %v233
    %v812 = vunpack.c.l.b16 %v234
    %v813 = vunpack.c.h.b16 %v234
    %v814 = vunpack.c.l.b16 %v235
    %v815 = vunpack.c.h.b16 %v235
    %v816 = vunpack.c.l.b16 %v236
    %v817 = vunpack.c.h.b16 %v236
    %v818 = vunpack.c.l.b16 %v237
    %v819 = vunpack.c.h.b16 %v237
    %v820 = vunpack.c.l.b16 %v238
    %v821 = vunpack.c.h.b16 %v238
    %v822 = vunpack.c.l.b16 %v239
    %v823 = vunpack.c.h.b16 %v239
    %v824 = vunpack.c.l.b16 %v240
    %v825 = vunpack.c.h.b16 %v240
    %v826 = vunpack.c.l.b16 %v241
    %v827 = vunpack.c.h.b16 %v241
    %v828 = vunpack.c.l.b16 %v242
    %v829 = vunpack.c.h.b16 %v242
    %v830 = vunpack.c.l.b16 %v243
    %v831 = vunpack.c.h.b16 %v243
    %v832 = vunpack.c.l.b16 %v244
    %v833 = vunpack.c.h.b16 %v244
    %v834 = vunpack.c.l.b16 %v245
    %v835 = vunpack.c.h.b16 %v245
    %v836 = vunpack.c.l.b16 %v246
    %v837 = vunpack.c.h.b16 %v246
    %v838 = vunpack.c.l.b16 %v247
    %v839 = vunpack.c.h.b16 %v247
    %v840 = vunpack.c.l.b16 %v248
    %v841 = vunpack.c.h.b16 %v248
    %v842 = vunpack.c.l.b16 %v249
    %v843 = vunpack.c.h.b16 %v249
    %v844 = vunpack.c.l.b16 %v250
    %v845 = vunpack.c.h.b16 %v250
    %v846 = vunpack.c.l.b16 %v251
    %v847 = vunpack.c.h.b16 %v251
    %v848 = vunpack.c.l.b16 %v252
    %v849 = vunpack.c.h.b16 %v252
    %v850 = vunpack.c.l.b16 %v253
    %v851 = vunpack.c.h.b16 %v253
    %v852 = vunpack.c.l.b16 %v254
    %v853 = vunpack.c.h.b16 %v254
    %v854 = vunpack.c.l.b16 %v255
    %v855 = vunpack.c.h.b16 %v255
    %v856 = vunpack.c.l.b16 %v256
    %v857 = vunpack.c.h.b16 %v256
    %v858 = vunpack.c.l.b16 %v257
    %v859 = vunpack.c.h.b16 %v257
    %v860 = vunpack.c.l.b16 %v258
    %v861 = vunpack.c.h.b16 %v258
    %v862 = vunpack.c.l.b16 %v259
    %v863 = vunpack.c.h.b16 %v259
    %v864 = vunpack.c.l.b16 %v260
    %v865 = vunpack.c.h.b16 %v260
    %v866 = vunpack.c.l.b16 %v261
    %v867 = vunpack.c.h.b16 %v261
    %v868 = vunpack.c.l.b16 %v262
    %v869 = vunpack.c.h.b16 %v262
    %v870 = vunpack.c.l.b16 %v263
    %v871 = vunpack.c.h.b16 %v263
    %v872 = vunpack.c.l.b16 %v264
    %v873 = vunpack.c.h.b16 %v264
    %v874 = vunpack.c.l.b16 %v265
    %v875 = vunpack.c.h.b16 %v265
    %v876 = vunpack.c.l.b16 %v266
    %v877 = vunpack.c.h.b16 %v266
    %v878 = vunpack.c.l.b16 %v267
    %v879 = vunpack.c.h.b16 %v267
    %v880 = vunpack.c.l.b16 %v268
    %v881 = vunpack.c.h.b16 %v268
    %v882 = vunpack.c.l.b16 %v269
    %v883 = vunpack.c.h.b16 %v269
    %v884 = vunpack.c.l.b16 %v270
    %v885 = vunpack.c.h.b16 %v270
    %v886 = vunpack.c.l.b16 %v271
    %v887 = vunpack.c.h.b16 %v271
    %v888 = vunpack.c.l.b16 %v272
    %v889 = vunpack.c.h.b16 %v272
    %v890 = vunpack.c.l.b16 %v273
    %v891 = vunpack.c.h.b16 %v273
    %v892 = vunpack.c.l.b16 %v274
    %v893 = vunpack.c.h.b16 %v274
    %v894 = vunpack.c.l.b16 %v275
    %v895 = vunpack.c.h.b16 %v275
    %v896 = vunpack.c.l.b16 %v276
    %v897 = vunpack.c.h.b16 %v276
    %v898 = vunpack.c.l.b16 %v277
    %v899 = vunpack.c.h.b16 %v277
    %v900 = vunpack.c.l.b16 %v278
    %v901 = vunpack.c.h.b16 %v278
    %v902 = vunpack.c.l.b16 %v279
    %v903 = vunpack.c.h.b16 %v279
    %v904 = vunpack.c.l.b16 %v280
    %v905 = vunpack.c.h.b16 %v280
    %v906 = vunpack.c.l.b16 %v281
    %v907 = vunpack.c.h.b16 %v281
    %v908 = vunpack.c.l.b16 %v282
    %v909 = vunpack.c.h.b16 %v282
    %v910 = vunpack.c.l.b16 %v283
    %v911 = vunpack.c.h.b16 %v283
    %v912 = vunpack.c.l.b16 %v284
    %v913 = vunpack.c.h.b16 %v284
    %v914 = vunpack.c.l.b16 %v285
    %v915 = vunpack.c.h.b16 %v285
    %v916 = vunpack.c.l.b16 %v286
    %v917 = vunpack.c.h.b16 %v286
    %v918 = vunpack.c.l.b16 %v287
    %v919 = vunpack.c.h.b16 %v287
    %v920 = vunpack.c.l.b16 %v288
    %v921 = vunpack.c.h.b16 %v288
    %v922 = vunpack.c.l.b16 %v289
    %v923 = vunpack.c.h.b16 %v289
    %v924 = vunpack.c.l.b16 %v290
    %v925 = vunpack.c.h.b16 %v290
    %v926 = vunpack.c.l.b16 %v291
    %v927 = vunpack.c.h.b16 %v291
    %v928 = vunpack.c.l.b16 %v292
    %v929 = vunpack.c.h.b16 %v292
    %v930 = vunpack.c.l.b16 %v293
    %v931 = vunpack.c.h.b16 %v293
    %v932 = vunpack.c.l.b16 %v294
    %v933 = vunpack.c.h.b16 %v294
    %v934 = vunpack.c.l.b16 %v295
    %v935 = vunpack.c.h.b16 %v295
    %v936 = vunpack.c.l.b16 %v296
    %v937 = vunpack.c.h.b16 %v296
    %v938 = vunpack.c.l.b16 %v297
    %v939 = vunpack.c.h.b16 %v297
    %v940 = vunpack.c.l.b16 %v298
    %v941 = vunpack.c.h.b16 %v298
    %v942 = vunpack.c.l.b16 %v299
    %v943 = vunpack.c.h.b16 %v299
    %v944 = vunpack.c.l.b16 %v300
    %v945 = vunpack.c.h.b16 %v300
    %v946 = vunpack.c.l.b16 %v301
    %v947 = vunpack.c.h.b16 %v301
    %v948 = vunpack.c.l.b16 %v302
    %v949 = vunpack.c.h.b16 %v302
    %v950 = vunpack.c.l.b16 %v303
    %v951 = vunpack.c.h.b16 %v303
    %v952 = vunpack.c.l.b16 %v304
    %v953 = vunpack.c.h.b16 %v304
    %v954 = vunpack.c.l.b16 %v305
    %v955 = vunpack.c.h.b16 %v305
    %v956 = vunpack.c.l.b16 %v306
    %v957 = vunpack.c.h.b16 %v306
    %v958 = vunpack.c.l.b16 %v307
    %v959 = vunpack.c.h.b16 %v307
    %v960 = vpack.c.b16 %v580, %v576
    %v961 = vpack.c.b16 %v581, %v577
    %v962 = vpack.c.b16 %v582, %v578
    %v963 = vpack.c.b16 %v583, %v579
    %v964 = vpack.c.b16 %v588, %v584
    %v965 = vpack.c.b16 %v589, %v585
    %v966 = vpack.c.b16 %v590, %v586
    %v967 = vpack.c.b16 %v591, %v587
    %v968 = vpack.c.b16 %v596, %v592
    %v969 = vpack.c.b16 %v597, %v593
    %v970 = vpack.c.b16 %v598, %v594
    %v971 = vpack.c.b16 %v599, %v595
    %v972 = vpack.c.b16 %v604, %v600
    %v973 = vpack.c.b16 %v605, %v601
    %v974 = vpack.c.b16 %v606, %v602
    %v975 = vpack.c.b16 %v607, %v603
    %v976 = vpack.c.b16 %v612, %v608
    %v977 = vpack.c.b16 %v613, %v609
    %v978 = vpack.c.b16 %v614, %v610
    %v979 = vpack.c.b16 %v615, %v611
    %v980 = vpack.c.b16 %v620, %v616
    %v981 = vpack.c.b16 %v621, %v617
    %v982 = vpack.c.b16 %v622, %v618
    %v983 = vpack.c.b16 %v623, %v619
    %v984 = vpack.c.b16 %v628, %v624
    %v985 = vpack.c.b16 %v629, %v625
    %v986 = vpack.c.b16 %v630, %v626
    %v987 = vpack.c.b16 %v631, %v627
    %v988 = vpack.c.b16 %v636, %v632
    %v989 = vpack.c.b16 %v637, %v633
    %v990 = vpack.c.b16 %v638, %v634
    %v991 = vpack.c.b16 %v639, %v635
    %v992 = vpack.c.b16 %v644, %v640
    %v993 = vpack.c.b16 %v645, %v641
    %v994 = vpack.c.b16 %v646, %v642
    %v995 = vpack.c.b16 %v647, %v643
    %v996 = vpack.c.b16 %v652, %v648
    %v997 = vpack.c.b16 %v653, %v649
    %v998 = vpack.c.b16 %v654, %v650
    %v999 = vpack.c.b16 %v655, %v651
    %v1000 = vpack.c.b16 %v660, %v656
    %v1001 = vpack.c.b16 %v661, %v657
    %v1002 = vpack.c.b16 %v662, %v658
    %v1003 = vpack.c.b16 %v663, %v659
    %v1004 = vpack.c.b16 %v668, %v664
    %v1005 = vpack.c.b16 %v669, %v665
    %v1006 = vpack.c.b16 %v670, %v666
    %v1007 = vpack.c.b16 %v671, %v667
    %v1008 = vpack.c.b16 %v676, %v672
    %v1009 = vpack.c.b16 %v677, %v673
    %v1010 = vpack.c.b16 %v678, %v674
    %v1011 = vpack.c.b16 %v679, %v675
    %v1012 = vpack.c.b16 %v684, %v680
    %v1013 = vpack.c.b16 %v685, %v681
    %v1014 = vpack.c.b16 %v686, %v682
    %v1015 = vpack.c.b16 %v687, %v683
    %v1016 = vpack.c.b16 %v692, %v688
    %v1017 = vpack.c.b16 %v693, %v689
    %v1018 = vpack.c.b16 %v694, %v690
    %v1019 = vpack.c.b16 %v695, %v691
    %v1020 = vpack.c.b16 %v700, %v696
    %v1021 = vpack.c.b16 %v701, %v697
    %v1022 = vpack.c.b16 %v702, %v698
    %v1023 = vpack.c.b16 %v703, %v699
    %v1024 = vpack.c.b16 %v708, %v704
    %v1025 = vpack.c.b16 %v709, %v705
    %v1026 = vpack.c.b16 %v710, %v706
    %v1027 = vpack.c.b16 %v711, %v707
    %v1028 = vpack.c.b16 %v716, %v712
    %v1029 = vpack.c.b16 %v717, %v713
    %v1030 = vpack.c.b16 %v718, %v714
    %v1031 = vpack.c.b16 %v719, %v715
    %v1032 = vpack.c.b16 %v724, %v720
    %v1033 = vpack.c.b16 %v725, %v721
    %v1034 = vpack.c.b16 %v726, %v722
    %v1035 = vpack.c.b16 %v727, %v723
    %v1036 = vpack.c.b16 %v732, %v728
    %v1037 = vpack.c.b16 %v733, %v729
    %v1038 = vpack.c.b16 %v734, %v730
    %v1039 = vpack.c.b16 %v735, %v731
    %v1040 = vpack.c.b16 %v740, %v736
    %v1041 = vpack.c.b16 %v741, %v737
    %v1042 = vpack.c.b16 %v742, %v738
    %v1043 = vpack.c.b16 %v743, %v739
    %v1044 = vpack.c.b16 %v748, %v744
    %v1045 = vpack.c.b16 %v749, %v745
    %v1046 = vpack.c.b16 %v750, %v746
    %v1047 = vpack.c.b16 %v751, %v747
    %v1048 = vpack.c.b16 %v756, %v752
    %v1049 = vpack.c.b16 %v757, %v753
    %v1050 = vpack.c.b16 %v758, %v754
    %v1051 = vpack.c.b16 %v759, %v755
    %v1052 = vpack.c.b16 %v764, %v760
    %v1053 = vpack.c.b16 %v765, %v761
    %v1054 = vpack.c.b16 %v766, %v762
    %v1055 = vpack.c.b16 %v767, %v763
    %v1056 = vpack.c.b16 %v772, %v768
    %v1057 = vpack.c.b16 %v773, %v769
    %v1058 = vpack.c.b16 %v774, %v770
    %v1059 = vpack.c.b16 %v775, %v771
    %v1060 = vpack.c.b16 %v780, %v776
    %v1061 = vpack.c.b16 %v781, %v777
    %v1062 = vpack.c.b16 %v782, %v778
    %v1063 = vpack.c.b16 %v783, %v779
    %v1064 = vpack.c.b16 %v788, %v784
    %v1065 = vpack.c.b16 %v789, %v785
    %v1066 = vpack.c.b16 %v790, %v786
    %v1067 = vpack.c.b16 %v791, %v787
    %v1068 = vpack.c.b16 %v796, %v792
    %v1069 = vpack.c.b16 %v797, %v793
    %v1070 = vpack.c.b16 %v798, %v794
    %v1071 = vpack.c.b16 %v799, %v795
    %v1072 = vpack.c.b16 %v804, %v800
    %v1073 = vpack.c.b16 %v805, %v801
    %v1074 = vpack.c.b16 %v806, %v802
    %v1075 = vpack.c.b16 %v807, %v803
    %v1076 = vpack.c.b16 %v812, %v808
    %v1077 = vpack.c.b16 %v813, %v809
    %v1078 = vpack.c.b16 %v814, %v810
    %v1079 = vpack.c.b16 %v815, %v811
    %v1080 = vpack.c.b16 %v820, %v816
    %v1081 = vpack.c.b16 %v821, %v817
    %v1082 = vpack.c.b16 %v822, %v818
    %v1083 = vpack.c.b16 %v823, %v819
    %v1084 = vpack.c.b16 %v828, %v824
    %v1085 = vpack.c.b16 %v829, %v825
    %v1086 = vpack.c.b16 %v830, %v826
    %v1087 = vpack.c.b16 %v831, %v827
    %v1088 = vpack.c.b16 %v836, %v832
    %v1089 = vpack.c.b16 %v837, %v833
    %v1090 = vpack.c.b16 %v838, %v834
    %v1091 = vpack.c.b16 %v839, %v835
    %v1092 = vpack.c.b16 %v844, %v840
    %v1093 = vpack.c.b16 %v845, %v841
    %v1094 = vpack.c.b16 %v846, %v842
    %v1095 = vpack.c.b16 %v847, %v843
    %v1096 = vpack.c.b16 %v852, %v848
    %v1097 = vpack.c.b16 %v853, %v849
    %v1098 = vpack.c.b16 %v854, %v850
    %v1099 = vpack.c.b16 %v855, %v851
    %v1100 = vpack.c.b16 %v860, %v856
    %v1101 = vpack.c.b16 %v861, %v857
    %v1102 = vpack.c.b16 %v862, %v858
    %v1103 = vpack.c.b16 %v863, %v859
    %v1104 = vpack.c.b16 %v868, %v864
    %v1105 = vpack.c.b16 %v869, %v865
    %v1106 = vpack.c.b16 %v870, %v866
    %v1107 = vpack.c.b16 %v871, %v867
    %v1108 = vpack.c.b16 %v876, %v872
    %v1109 = vpack.c.b16 %v877, %v873
    %v1110 = vpack.c.b16 %v878, %v874
    %v1111 = vpack.c.b16 %v879, %v875
    %v1112 = vpack.c.b16 %v884, %v880
    %v1113 = vpack.c.b16 %v885, %v881
    %v1114 = vpack.c.b16 %v886, %v882
    %v1115 = vpack.c.b16 %v887, %v883
    %v1116 = vpack.c.b16 %v892, %v888
    %v1117 = vpack.c.b16 %v893, %v889
    %v1118 = vpack.c.b16 %v894, %v890
    %v1119 = vpack.c.b16 %v895, %v891
    %v1120 = vpack.c.b16 %v900, %v896
    %v1121 = vpack.c.b16 %v901, %v897
    %v1122 = vpack.c.b16 %v902, %v898
    %v1123 = vpack.c.b16 %v903, %v899
    %v1124 = vpack.c.b16 %v908, %v904
    %v1125 = vpack.c.b16 %v909, %v905
    %v1126 = vpack.c.b16 %v910, %v906
    %v1127 = vpack.c.b16 %v911, %v907
    %v1128 = vpack.c.b16 %v916, %v912
    %v1129 = vpack.c.b16 %v917, %v913
    %v1130 = vpack.c.b16 %v918, %v914
    %v1131 = vpack.c.b16 %v919, %v915
    %v1132 = vpack.c.b16 %v924, %v920
    %v1133 = vpack.c.b16 %v925, %v921
    %v1134 = vpack.c.b16 %v926, %v922
    %v1135 = vpack.c.b16 %v927, %v923
    %v1136 = vpack.c.b16 %v932, %v928
    %v1137 = vpack.c.b16 %v933, %v929
    %v1138 = vpack.c.b16 %v934, %v930
    %v1139 = vpack.c.b16 %v935, %v931
    %v1140 = vpack.c.b16 %v940, %v936
    %v1141 = vpack.c.b16 %v941, %v937
    %v1142 = vpack.c.b16 %v942, %v938
    %v1143 = vpack.c.b16 %v943, %v939
    %v1144 = vpack.c.b16 %v948, %v944
    %v1145 = vpack.c.b16 %v949, %v945
    %v1146 = vpack.c.b16 %v950, %v946
    %v1147 = vpack.c.b16 %v951, %v947
    %v1148 = vpack.c.b16 %v956, %v952
    %v1149 = vpack.c.b16 %v957, %v953
    %v1150 = vpack.c.b16 %v958, %v954
    %v1151 = vpack.c.b16 %v959, %v955
    %1344 = vmatprep.subr.bf16.mxu0 %v961
    %1345 = vmatpush1.bf16.msra.mxu0 %v960
    %1346 = vmatprep.subr.bf16.mxu0 %v965
    %1347 = vmatpush1.bf16.msra.mxu0 %v964
    %1348 = vmatprep.subr.bf16.mxu0 %v969
    %1349 = vmatpush1.bf16.msra.mxu0 %v968
    %1350 = vmatprep.subr.bf16.mxu0 %v973
    %1351 = vmatpush1.bf16.msra.mxu0 %v972
    %1352 = vmatprep.subr.bf16.mxu0 %v977
    %1353 = vmatpush1.bf16.msra.mxu0 %v976
    %1354 = vmatprep.subr.bf16.mxu0 %v981
    %1355 = vmatpush1.bf16.msra.mxu0 %v980
    %1356 = vmatprep.subr.bf16.mxu0 %v985
    %1357 = vmatpush1.bf16.msra.mxu0 %v984
    %1358 = vmatprep.subr.bf16.mxu0 %v989
    %1359 = vmatpush1.bf16.msra.mxu0 %v988
    %1360 = vmatprep.subr.bf16.mxu0 %v993
    %1361 = vmatpush1.bf16.msra.mxu0 %v992
    %1362 = vmatprep.subr.bf16.mxu0 %v997
    %1363 = vmatpush1.bf16.msra.mxu0 %v996
    %1364 = vmatprep.subr.bf16.mxu0 %v1001
    %1365 = vmatpush1.bf16.msra.mxu0 %v1000
    %1366 = vmatprep.subr.bf16.mxu0 %v1005
    %1367 = vmatpush1.bf16.msra.mxu0 %v1004
    %1368 = vmatprep.subr.bf16.mxu0 %v1009
    %1369 = vmatpush1.bf16.msra.mxu0 %v1008
    %1370 = vmatprep.subr.bf16.mxu0 %v1013
    %1371 = vmatpush1.bf16.msra.mxu0 %v1012
    %1372 = vmatprep.subr.bf16.mxu0 %v1017
    %1373 = vmatpush1.bf16.msra.mxu0 %v1016
    %1374 = vmatprep.subr.bf16.mxu0 %v1021
    %1375 = vmatpush1.bf16.msra.mxu0 %v1020
    %1376 = vmatprep.mubr.bf16.mxu0 %v368
    %1377 = vmatmul.mubr.bf16.gmra.mrb[0].mxu0 %v354
    %v1378 = vpop.f32.mrb[0].mxu0
    %v1379 = vadd.f32 %v313, %v1378
    %v1380 = vpop.f32.mrb[0].mxu0
    %v1381 = vadd.f32 %v317, %v1380
    %v1382 = vpop.f32.mrb[0].mxu0
    %v1383 = vpop.f32.mrb[0].mxu0
    %1384 = vdwg.mxu0
    %1385 = vmatprep.subr.bf16.mxu0 %v1025
    %1386 = vmatpush1.bf16.msra.mxu0 %v1024
    %1387 = vmatprep.subr.bf16.mxu0 %v1029
    %1388 = vmatpush1.bf16.msra.mxu0 %v1028
    %1389 = vmatprep.subr.bf16.mxu0 %v1033
    %1390 = vmatpush1.bf16.msra.mxu0 %v1032
    %1391 = vmatprep.subr.bf16.mxu0 %v1037
    %1392 = vmatpush1.bf16.msra.mxu0 %v1036
    %1393 = vmatprep.subr.bf16.mxu0 %v1041
    %1394 = vmatpush1.bf16.msra.mxu0 %v1040
    %1395 = vmatprep.subr.bf16.mxu0 %v1045
    %1396 = vmatpush1.bf16.msra.mxu0 %v1044
    %1397 = vmatprep.subr.bf16.mxu0 %v1049
    %1398 = vmatpush1.bf16.msra.mxu0 %v1048
    %1399 = vmatprep.subr.bf16.mxu0 %v1053
    %1400 = vmatpush1.bf16.msra.mxu0 %v1052
    %1401 = vmatprep.subr.bf16.mxu0 %v1057
    %1402 = vmatpush1.bf16.msra.mxu0 %v1056
    %1403 = vmatprep.subr.bf16.mxu0 %v1061
    %1404 = vmatpush1.bf16.msra.mxu0 %v1060
    %1405 = vmatprep.subr.bf16.mxu0 %v1065
    %1406 = vmatpush1.bf16.msra.mxu0 %v1064
    %1407 = vmatprep.subr.bf16.mxu0 %v1069
    %1408 = vmatpush1.bf16.msra.mxu0 %v1068
    %1409 = vmatprep.subr.bf16.mxu0 %v1073
    %1410 = vmatpush1.bf16.msra.mxu0 %v1072
    %1411 = vmatprep.subr.bf16.mxu0 %v1077
    %1412 = vmatpush1.bf16.msra.mxu0 %v1076
    %1413 = vmatprep.subr.bf16.mxu0 %v1081
    %1414 = vmatpush1.bf16.msra.mxu0 %v1080
    %1415 = vmatprep.subr.bf16.mxu0 %v1085
    %1416 = vmatpush1.bf16.msra.mxu0 %v1084
    %1417 = vmatprep.mubr.bf16.mxu0 %v377
    %1418 = vmatmul.mubr.bf16.gmra.mrb[0].mxu0 %v376
    %v1419 = vpop.f32.mrb[0].mxu0
    %v1420 = vadd.f32 %v1379, %v1419
    %v1421 = vpop.f32.mrb[0].mxu0
    %v1422 = vadd.f32 %v1381, %v1421
    %v1423 = vpop.f32.mrb[0].mxu0
    %v1424 = vpop.f32.mrb[0].mxu0
    %1425 = vdwg.mxu0
    %1426 = vmatprep.subr.bf16.mxu0 %v1089
    %1427 = vmatpush1.bf16.msra.mxu0 %v1088
    %1428 = vmatprep.subr.bf16.mxu0 %v1093
    %1429 = vmatpush1.bf16.msra.mxu0 %v1092
    %1430 = vmatprep.subr.bf16.mxu0 %v1097
    %1431 = vmatpush1.bf16.msra.mxu0 %v1096
    %1432 = vmatprep.subr.bf16.mxu0 %v1101
    %1433 = vmatpush1.bf16.msra.mxu0 %v1100
    %1434 = vmatprep.subr.bf16.mxu0 %v1105
    %1435 = vmatpush1.bf16.msra.mxu0 %v1104
    %1436 = vmatprep.subr.bf16.mxu0 %v1109
    %1437 = vmatpush1.bf16.msra.mxu0 %v1108
    %1438 = vmatprep.subr.bf16.mxu0 %v1113
    %1439 = vmatpush1.bf16.msra.mxu0 %v1112
    %1440 = vmatprep.subr.bf16.mxu0 %v1117
    %1441 = vmatpush1.bf16.msra.mxu0 %v1116
    %1442 = vmatprep.subr.bf16.mxu0 %v1121
    %1443 = vmatpush1.bf16.msra.mxu0 %v1120
    %1444 = vmatprep.subr.bf16.mxu0 %v1125
    %1445 = vmatpush1.bf16.msra.mxu0 %v1124
    %1446 = vmatprep.subr.bf16.mxu0 %v1129
    %1447 = vmatpush1.bf16.msra.mxu0 %v1128
    %1448 = vmatprep.subr.bf16.mxu0 %v1133
    %1449 = vmatpush1.bf16.msra.mxu0 %v1132
    %1450 = vmatprep.subr.bf16.mxu0 %v1137
    %1451 = vmatpush1.bf16.msra.mxu0 %v1136
    %1452 = vmatprep.subr.bf16.mxu0 %v1141
    %1453 = vmatpush1.bf16.msra.mxu0 %v1140
    %1454 = vmatprep.subr.bf16.mxu0 %v1145
    %1455 = vmatpush1.bf16.msra.mxu0 %v1144
    %1456 = vmatprep.subr.bf16.mxu0 %v1149
    %1457 = vmatpush1.bf16.msra.mxu0 %v1148
    %1458 = vmatprep.mubr.bf16.mxu0 %v375
    %1459 = vmatmul.mubr.bf16.gmra.mrb[0].mxu0 %v361
    %v1460 = vpop.f32.mrb[0].mxu0
    %v1461 = vadd.f32 %v1420, %v1460
    %v1462 = vpop.f32.mrb[0].mxu0
    %v1463 = vadd.f32 %v1422, %v1462
    %v1464 = vpop.f32.mrb[0].mxu0
    %v1465 = vpop.f32.mrb[0].mxu0
    %1466 = vdwg.mxu0
    %1467 = vmatprep.subr.bf16.mxu0 %v963
    %1468 = vmatpush1.bf16.msra.mxu0 %v962
    %1469 = vmatprep.subr.bf16.mxu0 %v967
    %1470 = vmatpush1.bf16.msra.mxu0 %v966
    %1471 = vmatprep.subr.bf16.mxu0 %v971
    %1472 = vmatpush1.bf16.msra.mxu0 %v970
    %1473 = vmatprep.subr.bf16.mxu0 %v975
    %1474 = vmatpush1.bf16.msra.mxu0 %v974
    %1475 = vmatprep.subr.bf16.mxu0 %v979
    %1476 = vmatpush1.bf16.msra.mxu0 %v978
    %1477 = vmatprep.subr.bf16.mxu0 %v983
    %1478 = vmatpush1.bf16.msra.mxu0 %v982
    %1479 = vmatprep.subr.bf16.mxu0 %v987
    %1480 = vmatpush1.bf16.msra.mxu0 %v986
    %1481 = vmatprep.subr.bf16.mxu0 %v991
    %1482 = vmatpush1.bf16.msra.mxu0 %v990
    %1483 = vmatprep.subr.bf16.mxu0 %v995
    %1484 = vmatpush1.bf16.msra.mxu0 %v994
    %1485 = vmatprep.subr.bf16.mxu0 %v999
    %1486 = vmatpush1.bf16.msra.mxu0 %v998
    %1487 = vmatprep.subr.bf16.mxu0 %v1003
    %1488 = vmatpush1.bf16.msra.mxu0 %v1002
    %1489 = vmatprep.subr.bf16.mxu0 %v1007
    %1490 = vmatpush1.bf16.msra.mxu0 %v1006
    %1491 = vmatprep.subr.bf16.mxu0 %v1011
    %1492 = vmatpush1.bf16.msra.mxu0 %v1010
    %1493 = vmatprep.subr.bf16.mxu0 %v1015
    %1494 = vmatpush1.bf16.msra.mxu0 %v1014
    %1495 = vmatprep.subr.bf16.mxu0 %v1019
    %1496 = vmatpush1.bf16.msra.mxu0 %v1018
    %1497 = vmatprep.subr.bf16.mxu0 %v1023
    %1498 = vmatpush1.bf16.msra.mxu0 %v1022
    %1499 = vmatprep.mubr.bf16.mxu0 %v368
    %1500 = vmatmul.mubr.bf16.gmra.mrb[0].mxu0 %v354
    %v1501 = vpop.f32.mrb[0].mxu0
    %v1502 = vadd.f32 %v321, %v1501
    %v1503 = vpop.f32.mrb[0].mxu0
    %v1504 = vadd.f32 %v325, %v1503
    %v1505 = vpop.f32.mrb[0].mxu0
    %v1506 = vpop.f32.mrb[0].mxu0
    %1507 = vdwg.mxu0
    %1508 = vmatprep.subr.bf16.mxu0 %v1027
    %1509 = vmatpush1.bf16.msra.mxu0 %v1026
    %1510 = vmatprep.subr.bf16.mxu0 %v1031
    %1511 = vmatpush1.bf16.msra.mxu0 %v1030
    %1512 = vmatprep.subr.bf16.mxu0 %v1035
    %1513 = vmatpush1.bf16.msra.mxu0 %v1034
    %1514 = vmatprep.subr.bf16.mxu0 %v1039
    %1515 = vmatpush1.bf16.msra.mxu0 %v1038
    %1516 = vmatprep.subr.bf16.mxu0 %v1043
    %1517 = vmatpush1.bf16.msra.mxu0 %v1042
    %1518 = vmatprep.subr.bf16.mxu0 %v1047
    %1519 = vmatpush1.bf16.msra.mxu0 %v1046
    %1520 = vmatprep.subr.bf16.mxu0 %v1051
    %1521 = vmatpush1.bf16.msra.mxu0 %v1050
    %1522 = vmatprep.subr.bf16.mxu0 %v1055
    %1523 = vmatpush1.bf16.msra.mxu0 %v1054
    %1524 = vmatprep.subr.bf16.mxu0 %v1059
    %1525 = vmatpush1.bf16.msra.mxu0 %v1058
    %1526 = vmatprep.subr.bf16.mxu0 %v1063
    %1527 = vmatpush1.bf16.msra.mxu0 %v1062
    %1528 = vmatprep.subr.bf16.mxu0 %v1067
    %1529 = vmatpush1.bf16.msra.mxu0 %v1066
    %1530 = vmatprep.subr.bf16.mxu0 %v1071
    %1531 = vmatpush1.bf16.msra.mxu0 %v1070
    %1532 = vmatprep.subr.bf16.mxu0 %v1075
    %1533 = vmatpush1.bf16.msra.mxu0 %v1074
    %1534 = vmatprep.subr.bf16.mxu0 %v1079
    %1535 = vmatpush1.bf16.msra.mxu0 %v1078
    %1536 = vmatprep.subr.bf16.mxu0 %v1083
    %1537 = vmatpush1.bf16.msra.mxu0 %v1082
    %1538 = vmatprep.subr.bf16.mxu0 %v1087
    %1539 = vmatpush1.bf16.msra.mxu0 %v1086
    %1540 = vmatprep.mubr.bf16.mxu0 %v377
    %1541 = vmatmul.mubr.bf16.gmra.mrb[0].mxu0 %v376
    %v1542 = vpop.f32.mrb[0].mxu0
    %v1543 = vadd.f32 %v1502, %v1542
    %v1544 = vpop.f32.mrb[0].mxu0
    %v1545 = vadd.f32 %v1504, %v1544
    %v1546 = vpop.f32.mrb[0].mxu0
    %v1547 = vpop.f32.mrb[0].mxu0
    %1548 = vdwg.mxu0
    %1549 = vmatprep.subr.bf16.mxu0 %v1091
    %1550 = vmatpush1.bf16.msra.mxu0 %v1090
    %1551 = vmatprep.subr.bf16.mxu0 %v1095
    %1552 = vmatpush1.bf16.msra.mxu0 %v1094
    %1553 = vmatprep.subr.bf16.mxu0 %v1099
    %1554 = vmatpush1.bf16.msra.mxu0 %v1098
    %1555 = vmatprep.subr.bf16.mxu0 %v1103
    %1556 = vmatpush1.bf16.msra.mxu0 %v1102
    %1557 = vmatprep.subr.bf16.mxu0 %v1107
    %1558 = vmatpush1.bf16.msra.mxu0 %v1106
    %1559 = vmatprep.subr.bf16.mxu0 %v1111
    %1560 = vmatpush1.bf16.msra.mxu0 %v1110
    %1561 = vmatprep.subr.bf16.mxu0 %v1115
    %1562 = vmatpush1.bf16.msra.mxu0 %v1114
    %1563 = vmatprep.subr.bf16.mxu0 %v1119
    %1564 = vmatpush1.bf16.msra.mxu0 %v1118
    %1565 = vmatprep.subr.bf16.mxu0 %v1123
    %1566 = vmatpush1.bf16.msra.mxu0 %v1122
    %1567 = vmatprep.subr.bf16.mxu0 %v1127
    %1568 = vmatpush1.bf16.msra.mxu0 %v1126
    %1569 = vmatprep.subr.bf16.mxu0 %v1131
    %1570 = vmatpush1.bf16.msra.mxu0 %v1130
    %1571 = vmatprep.subr.bf16.mxu0 %v1135
    %1572 = vmatpush1.bf16.msra.mxu0 %v1134
    %1573 = vmatprep.subr.bf16.mxu0 %v1139
    %1574 = vmatpush1.bf16.msra.mxu0 %v1138
    %1575 = vmatprep.subr.bf16.mxu0 %v1143
    %1576 = vmatpush1.bf16.msra.mxu0 %v1142
    %1577 = vmatprep.subr.bf16.mxu0 %v1147
    %1578 = vmatpush1.bf16.msra.mxu0 %v1146
    %1579 = vmatprep.subr.bf16.mxu0 %v1151
    %1580 = vmatpush1.bf16.msra.mxu0 %v1150
    %1581 = vmatprep.mubr.bf16.mxu0 %v375
    %1582 = vmatmul.mubr.bf16.gmra.mrb[0].mxu0 %v361
    %v1583 = vpop.f32.mrb[0].mxu0
    %v1584 = vadd.f32 %v1543, %v1583
    %v1585 = vpop.f32.mrb[0].mxu0
    %v1586 = vadd.f32 %v1545, %v1585
    %v1587 = vpop.f32.mrb[0].mxu0
    %v1588 = vpop.f32.mrb[0].mxu0
    %1589 = vdwg.mxu0
    %v1590 = vmax.f32 %v1461, 0.0
    %v1591 = vmax.f32 %v1463, 0.0
    %v1592 = vmax.f32 %v1584, 0.0
    %v1593 = vmax.f32 %v1586, 0.0
    %v1594 = vpack.c.bf16 %v1590, %v1590
    %v1595 = vpack.c.bf16 %v1591, %v1591
    %v1596 = vpack.c.bf16 %v1592, %v1592
    %v1597 = vpack.c.bf16 %v1593, %v1593
    %v1598 = vld [vmem:[#allocation8] sm:$0xff]
    %v1599 = vld [vmem:[#allocation8 + $0x8] sm:$0xff]
    %v1600 = vld [vmem:[#allocation8 + $0x10] sm:$0xff]
    %v1601 = vld [vmem:[#allocation8 + $0x18] sm:$0xff]
    %v1602 = vld [vmem:[#allocation8 + $0x20] sm:$0xff]
    %v1603 = vld [vmem:[#allocation8 + $0x28] sm:$0xff]
    %v1604 = vld [vmem:[#allocation8 + $0x30] sm:$0xff]
    %v1605 = vld [vmem:[#allocation8 + $0x38] sm:$0xff]
    %v1606 = vld [vmem:[#allocation8 + $0x40] sm:$0xff]
    %v1607 = vld [vmem:[#allocation8 + $0x48] sm:$0xff]
    %v1608 = vld [vmem:[#allocation8 + $0x50] sm:$0xff]
    %v1609 = vld [vmem:[#allocation8 + $0x58] sm:$0xff]
    %v1610 = vld [vmem:[#allocation8 + $0x60] sm:$0xff]
    %v1611 = vld [vmem:[#allocation8 + $0x68] sm:$0xff]
    %v1612 = vld [vmem:[#allocation8 + $0x70] sm:$0xff]
    %v1613 = vld [vmem:[#allocation8 + $0x78] sm:$0xff]
    %v1614 = vld [vmem:[#allocation8 + $0x80] sm:$0xff]
    %v1615 = vld [vmem:[#allocation8 + $0x88] sm:$0xff]
    %v1616 = vld [vmem:[#allocation8 + $0x90] sm:$0xff]
    %v1617 = vld [vmem:[#allocation8 + $0x98] sm:$0xff]
    %v1618 = vld [vmem:[#allocation8 + $0xa0] sm:$0xff]
    %v1619 = vld [vmem:[#allocation8 + $0xa8] sm:$0xff]
    %v1620 = vld [vmem:[#allocation8 + $0xb0] sm:$0xff]
    %v1621 = vld [vmem:[#allocation8 + $0xb8] sm:$0xff]
    %v1622 = vld [vmem:[#allocation8 + $0xc0] sm:$0xff]
    %v1623 = vld [vmem:[#allocation8 + $0xc8] sm:$0xff]
    %v1624 = vld [vmem:[#allocation8 + $0xd0] sm:$0xff]
    %v1625 = vld [vmem:[#allocation8 + $0xd8] sm:$0xff]
    %v1626 = vld [vmem:[#allocation8 + $0xe0] sm:$0xff]
    %v1627 = vld [vmem:[#allocation8 + $0xe8] sm:$0xff]
    %v1628 = vld [vmem:[#allocation8 + $0xf0] sm:$0xff]
    %v1629 = vld [vmem:[#allocation8 + $0xf8] sm:$0xff]
    %v1630 = vld [vmem:[#allocation8 + $0x100] sm:$0xff]
    %v1631 = vld [vmem:[#allocation8 + $0x108] sm:$0xff]
    %v1632 = vld [vmem:[#allocation8 + $0x110] sm:$0xff]
    %v1633 = vld [vmem:[#allocation8 + $0x118] sm:$0xff]
    %v1634 = vld [vmem:[#allocation8 + $0x120] sm:$0xff]
    %v1635 = vld [vmem:[#allocation8 + $0x128] sm:$0xff]
    %v1636 = vld [vmem:[#allocation8 + $0x130] sm:$0xff]
    %v1637 = vld [vmem:[#allocation8 + $0x138] sm:$0xff]
    %v1638 = vld [vmem:[#allocation8 + $0x140] sm:$0xff]
    %v1639 = vld [vmem:[#allocation8 + $0x148] sm:$0xff]
    %v1640 = vld [vmem:[#allocation8 + $0x150] sm:$0xff]
    %v1641 = vld [vmem:[#allocation8 + $0x158] sm:$0xff]
    %v1642 = vld [vmem:[#allocation8 + $0x160] sm:$0xff]
    %v1643 = vld [vmem:[#allocation8 + $0x168] sm:$0xff]
    %v1644 = vld [vmem:[#allocation8 + $0x170] sm:$0xff]
    %v1645 = vld [vmem:[#allocation8 + $0x178] sm:$0xff]
    %v1646 = vld [vmem:[#allocation8 + $0x180] sm:$0xff]
    %v1647 = vld [vmem:[#allocation8 + $0x188] sm:$0xff]
    %v1648 = vld [vmem:[#allocation8 + $0x190] sm:$0xff]
    %v1649 = vld [vmem:[#allocation8 + $0x198] sm:$0xff]
    %v1650 = vld [vmem:[#allocation8 + $0x1a0] sm:$0xff]
    %v1651 = vld [vmem:[#allocation8 + $0x1a8] sm:$0xff]
    %v1652 = vld [vmem:[#allocation8 + $0x1b0] sm:$0xff]
    %v1653 = vld [vmem:[#allocation8 + $0x1b8] sm:$0xff]
    %v1654 = vld [vmem:[#allocation8 + $0x1c0] sm:$0xff]
    %v1655 = vld [vmem:[#allocation8 + $0x1c8] sm:$0xff]
    %v1656 = vld [vmem:[#allocation8 + $0x1d0] sm:$0xff]
    %v1657 = vld [vmem:[#allocation8 + $0x1d8] sm:$0xff]
    %v1658 = vld [vmem:[#allocation8 + $0x1e0] sm:$0xff]
    %v1659 = vld [vmem:[#allocation8 + $0x1e8] sm:$0xff]
    %v1660 = vld [vmem:[#allocation8 + $0x1f0] sm:$0xff]
    %v1661 = vld [vmem:[#allocation8 + $0x1f8] sm:$0xff]
    %v1662 = vld [vmem:[#allocation10] sm:$0x3]
    %v1664 = vlaneseq
    %v1665 = vshrl.u32 %v1664, 7
    %v1666 = vsub.s32 0, %v1665
    %v1667 = vrot.slane %v1662, %v1666
    %v1668 = vlaneseq
    %v1669 = vshrl.u32 %v1668, 7
    %v1670 = vsub.s32 1, %v1669
    %v1671 = vrot.slane %v1662, %v1670
    %v1738 = vunpack.c.l.b16 %v1598
    %v1739 = vunpack.c.h.b16 %v1598
    %v1740 = vunpack.c.l.b16 %v1599
    %v1741 = vunpack.c.h.b16 %v1599
    %v1742 = vunpack.c.l.b16 %v1600
    %v1743 = vunpack.c.h.b16 %v1600
    %v1744 = vunpack.c.l.b16 %v1601
    %v1745 = vunpack.c.h.b16 %v1601
    %v1746 = vunpack.c.l.b16 %v1602
    %v1747 = vunpack.c.h.b16 %v1602
    %v1748 = vunpack.c.l.b16 %v1603
    %v1749 = vunpack.c.h.b16 %v1603
    %v1750 = vunpack.c.l.b16 %v1604
    %v1751 = vunpack.c.h.b16 %v1604
    %v1752 = vunpack.c.l.b16 %v1605
    %v1753 = vunpack.c.h.b16 %v1605
    %v1754 = vunpack.c.l.b16 %v1606
    %v1755 = vunpack.c.h.b16 %v1606
    %v1756 = vunpack.c.l.b16 %v1607
    %v1757 = vunpack.c.h.b16 %v1607
    %v1758 = vunpack.c.l.b16 %v1608
    %v1759 = vunpack.c.h.b16 %v1608
    %v1760 = vunpack.c.l.b16 %v1609
    %v1761 = vunpack.c.h.b16 %v1609
    %v1762 = vunpack.c.l.b16 %v1610
    %v1763 = vunpack.c.h.b16 %v1610
    %v1764 = vunpack.c.l.b16 %v1611
    %v1765 = vunpack.c.h.b16 %v1611
    %v1766 = vunpack.c.l.b16 %v1612
    %v1767 = vunpack.c.h.b16 %v1612
    %v1768 = vunpack.c.l.b16 %v1613
    %v1769 = vunpack.c.h.b16 %v1613
    %v1770 = vunpack.c.l.b16 %v1614
    %v1771 = vunpack.c.h.b16 %v1614
    %v1772 = vunpack.c.l.b16 %v1615
    %v1773 = vunpack.c.h.b16 %v1615
    %v1774 = vunpack.c.l.b16 %v1616
    %v1775 = vunpack.c.h.b16 %v1616
    %v1776 = vunpack.c.l.b16 %v1617
    %v1777 = vunpack.c.h.b16 %v1617
    %v1778 = vunpack.c.l.b16 %v1618
    %v1779 = vunpack.c.h.b16 %v1618
    %v1780 = vunpack.c.l.b16 %v1619
    %v1781 = vunpack.c.h.b16 %v1619
    %v1782 = vunpack.c.l.b16 %v1620
    %v1783 = vunpack.c.h.b16 %v1620
    %v1784 = vunpack.c.l.b16 %v1621
    %v1785 = vunpack.c.h.b16 %v1621
    %v1786 = vunpack.c.l.b16 %v1622
    %v1787 = vunpack.c.h.b16 %v1622
    %v1788 = vunpack.c.l.b16 %v1623
    %v1789 = vunpack.c.h.b16 %v1623
    %v1790 = vunpack.c.l.b16 %v1624
    %v1791 = vunpack.c.h.b16 %v1624
    %v1792 = vunpack.c.l.b16 %v1625
    %v1793 = vunpack.c.h.b16 %v1625
    %v1794 = vunpack.c.l.b16 %v1626
    %v1795 = vunpack.c.h.b16 %v1626
    %v1796 = vunpack.c.l.b16 %v1627
    %v1797 = vunpack.c.h.b16 %v1627
    %v1798 = vunpack.c.l.b16 %v1628
    %v1799 = vunpack.c.h.b16 %v1628
    %v1800 = vunpack.c.l.b16 %v1629
    %v1801 = vunpack.c.h.b16 %v1629
    %v1802 = vunpack.c.l.b16 %v1630
    %v1803 = vunpack.c.h.b16 %v1630
    %v1804 = vunpack.c.l.b16 %v1631
    %v1805 = vunpack.c.h.b16 %v1631
    %v1806 = vunpack.c.l.b16 %v1632
    %v1807 = vunpack.c.h.b16 %v1632
    %v1808 = vunpack.c.l.b16 %v1633
    %v1809 = vunpack.c.h.b16 %v1633
    %v1810 = vunpack.c.l.b16 %v1634
    %v1811 = vunpack.c.h.b16 %v1634
    %v1812 = vunpack.c.l.b16 %v1635
    %v1813 = vunpack.c.h.b16 %v1635
    %v1814 = vunpack.c.l.b16 %v1636
    %v1815 = vunpack.c.h.b16 %v1636
    %v1816 = vunpack.c.l.b16 %v1637
    %v1817 = vunpack.c.h.b16 %v1637
    %v1818 = vunpack.c.l.b16 %v1638
    %v1819 = vunpack.c.h.b16 %v1638
    %v1820 = vunpack.c.l.b16 %v1639
    %v1821 = vunpack.c.h.b16 %v1639
    %v1822 = vunpack.c.l.b16 %v1640
    %v1823 = vunpack.c.h.b16 %v1640
    %v1824 = vunpack.c.l.b16 %v1641
    %v1825 = vunpack.c.h.b16 %v1641
    %v1826 = vunpack.c.l.b16 %v1642
    %v1827 = vunpack.c.h.b16 %v1642
    %v1828 = vunpack.c.l.b16 %v1643
    %v1829 = vunpack.c.h.b16 %v1643
    %v1830 = vunpack.c.l.b16 %v1644
    %v1831 = vunpack.c.h.b16 %v1644
    %v1832 = vunpack.c.l.b16 %v1645
    %v1833 = vunpack.c.h.b16 %v1645
    %v1834 = vunpack.c.l.b16 %v1646
    %v1835 = vunpack.c.h.b16 %v1646
    %v1836 = vunpack.c.l.b16 %v1647
    %v1837 = vunpack.c.h.b16 %v1647
    %v1838 = vunpack.c.l.b16 %v1648
    %v1839 = vunpack.c.h.b16 %v1648
    %v1840 = vunpack.c.l.b16 %v1649
    %v1841 = vunpack.c.h.b16 %v1649
    %v1842 = vunpack.c.l.b16 %v1650
    %v1843 = vunpack.c.h.b16 %v1650
    %v1844 = vunpack.c.l.b16 %v1651
    %v1845 = vunpack.c.h.b16 %v1651
    %v1846 = vunpack.c.l.b16 %v1652
    %v1847 = vunpack.c.h.b16 %v1652
    %v1848 = vunpack.c.l.b16 %v1653
    %v1849 = vunpack.c.h.b16 %v1653
    %v1850 = vunpack.c.l.b16 %v1654
    %v1851 = vunpack.c.h.b16 %v1654
    %v1852 = vunpack.c.l.b16 %v1655
    %v1853 = vunpack.c.h.b16 %v1655
    %v1854 = vunpack.c.l.b16 %v1656
    %v1855 = vunpack.c.h.b16 %v1656
    %v1856 = vunpack.c.l.b16 %v1657
    %v1857 = vunpack.c.h.b16 %v1657
    %v1858 = vunpack.c.l.b16 %v1658
    %v1859 = vunpack.c.h.b16 %v1658
    %v1860 = vunpack.c.l.b16 %v1659
    %v1861 = vunpack.c.h.b16 %v1659
    %v1862 = vunpack.c.l.b16 %v1660
    %v1863 = vunpack.c.h.b16 %v1660
    %v1864 = vunpack.c.l.b16 %v1661
    %v1865 = vunpack.c.h.b16 %v1661
    %v1866 = vpack.c.b16 %v1740, %v1738
    %v1867 = vpack.c.b16 %v1741, %v1739
    %v1868 = vpack.c.b16 %v1744, %v1742
    %v1869 = vpack.c.b16 %v1745, %v1743
    %v1870 = vpack.c.b16 %v1748, %v1746
    %v1871 = vpack.c.b16 %v1749, %v1747
    %v1872 = vpack.c.b16 %v1752, %v1750
    %v1873 = vpack.c.b16 %v1753, %v1751
    %v1874 = vpack.c.b16 %v1756, %v1754
    %v1875 = vpack.c.b16 %v1757, %v1755
    %v1876 = vpack.c.b16 %v1760, %v1758
    %v1877 = vpack.c.b16 %v1761, %v1759
    %v1878 = vpack.c.b16 %v1764, %v1762
    %v1879 = vpack.c.b16 %v1765, %v1763
    %v1880 = vpack.c.b16 %v1768, %v1766
    %v1881 = vpack.c.b16 %v1769, %v1767
    %v1882 = vpack.c.b16 %v1772, %v1770
    %v1883 = vpack.c.b16 %v1773, %v1771
    %v1884 = vpack.c.b16 %v1776, %v1774
    %v1885 = vpack.c.b16 %v1777, %v1775
    %v1886 = vpack.c.b16 %v1780, %v1778
    %v1887 = vpack.c.b16 %v1781, %v1779
    %v1888 = vpack.c.b16 %v1784, %v1782
    %v1889 = vpack.c.b16 %v1785, %v1783
    %v1890 = vpack.c.b16 %v1788, %v1786
    %v1891 = vpack.c.b16 %v1789, %v1787
    %v1892 = vpack.c.b16 %v1792, %v1790
    %v1893 = vpack.c.b16 %v1793, %v1791
    %v1894 = vpack.c.b16 %v1796, %v1794
    %v1895 = vpack.c.b16 %v1797, %v1795
    %v1896 = vpack.c.b16 %v1800, %v1798
    %v1897 = vpack.c.b16 %v1801, %v1799
    %v1898 = vpack.c.b16 %v1804, %v1802
    %v1899 = vpack.c.b16 %v1805, %v1803
    %v1900 = vpack.c.b16 %v1808, %v1806
    %v1901 = vpack.c.b16 %v1809, %v1807
    %v1902 = vpack.c.b16 %v1812, %v1810
    %v1903 = vpack.c.b16 %v1813, %v1811
    %v1904 = vpack.c.b16 %v1816, %v1814
    %v1905 = vpack.c.b16 %v1817, %v1815
    %v1906 = vpack.c.b16 %v1820, %v1818
    %v1907 = vpack.c.b16 %v1821, %v1819
    %v1908 = vpack.c.b16 %v1824, %v1822
    %v1909 = vpack.c.b16 %v1825, %v1823
    %v1910 = vpack.c.b16 %v1828, %v1826
    %v1911 = vpack.c.b16 %v1829, %v1827
    %v1912 = vpack.c.b16 %v1832, %v1830
    %v1913 = vpack.c.b16 %v1833, %v1831
    %v1914 = vpack.c.b16 %v1836, %v1834
    %v1915 = vpack.c.b16 %v1837, %v1835
    %v1916 = vpack.c.b16 %v1840, %v1838
    %v1917 = vpack.c.b16 %v1841, %v1839
    %v1918 = vpack.c.b16 %v1844, %v1842
    %v1919 = vpack.c.b16 %v1845, %v1843
    %v1920 = vpack.c.b16 %v1848, %v1846
    %v1921 = vpack.c.b16 %v1849, %v1847
    %v1922 = vpack.c.b16 %v1852, %v1850
    %v1923 = vpack.c.b16 %v1853, %v1851
    %v1924 = vpack.c.b16 %v1856, %v1854
    %v1925 = vpack.c.b16 %v1857, %v1855
    %v1926 = vpack.c.b16 %v1860, %v1858
    %v1927 = vpack.c.b16 %v1861, %v1859
    %v1928 = vpack.c.b16 %v1864, %v1862
    %v1929 = vpack.c.b16 %v1865, %v1863
    %1994 = vmatprep.subr.bf16.mxu0 %v1867
    %1995 = vmatpush1.bf16.msra.mxu0 %v1866
    %1996 = vmatprep.subr.bf16.mxu0 %v1869
    %1997 = vmatpush1.bf16.msra.mxu0 %v1868
    %1998 = vmatprep.subr.bf16.mxu0 %v1871
    %1999 = vmatpush1.bf16.msra.mxu0 %v1870
    %2000 = vmatprep.subr.bf16.mxu0 %v1873
    %2001 = vmatpush1.bf16.msra.mxu0 %v1872
    %2002 = vmatprep.subr.bf16.mxu0 %v1875
    %2003 = vmatpush1.bf16.msra.mxu0 %v1874
    %2004 = vmatprep.subr.bf16.mxu0 %v1877
    %2005 = vmatpush1.bf16.msra.mxu0 %v1876
    %2006 = vmatprep.subr.bf16.mxu0 %v1879
    %2007 = vmatpush1.bf16.msra.mxu0 %v1878
    %2008 = vmatprep.subr.bf16.mxu0 %v1881
    %2009 = vmatpush1.bf16.msra.mxu0 %v1880
    %2010 = vmatprep.subr.bf16.mxu0 %v1883
    %2011 = vmatpush1.bf16.msra.mxu0 %v1882
    %2012 = vmatprep.subr.bf16.mxu0 %v1885
    %2013 = vmatpush1.bf16.msra.mxu0 %v1884
    %2014 = vmatprep.subr.bf16.mxu0 %v1887
    %2015 = vmatpush1.bf16.msra.mxu0 %v1886
    %2016 = vmatprep.subr.bf16.mxu0 %v1889
    %2017 = vmatpush1.bf16.msra.mxu0 %v1888
    %2018 = vmatprep.subr.bf16.mxu0 %v1891
    %2019 = vmatpush1.bf16.msra.mxu0 %v1890
    %2020 = vmatprep.subr.bf16.mxu0 %v1893
    %2021 = vmatpush1.bf16.msra.mxu0 %v1892
    %2022 = vmatprep.subr.bf16.mxu0 %v1895
    %2023 = vmatpush1.bf16.msra.mxu0 %v1894
    %2024 = vmatprep.subr.bf16.mxu0 %v1897
    %2025 = vmatpush1.bf16.msra.mxu0 %v1896
    %2026 = vmatprep.mubr.bf16.mxu0 %v1595
    %2027 = vmatmul.mubr.bf16.gmra.mrb[0].mxu0 %v1594
    %v2028 = vpop.f32.mrb[0].mxu0
    %v2029 = vadd.f32 %v1667, %v2028
    %v2030 = vpop.f32.mrb[0].mxu0
    %v2031 = vadd.f32 %v1671, %v2030
    %v2032 = vpop.f32.mrb[0].mxu0
    %v2033 = vpop.f32.mrb[0].mxu0
    %2034 = vdwg.mxu0
    %2035 = vmatprep.subr.bf16.mxu0 %v1899
    %2036 = vmatpush1.bf16.msra.mxu0 %v1898
    %2037 = vmatprep.subr.bf16.mxu0 %v1901
    %2038 = vmatpush1.bf16.msra.mxu0 %v1900
    %2039 = vmatprep.subr.bf16.mxu0 %v1903
    %2040 = vmatpush1.bf16.msra.mxu0 %v1902
    %2041 = vmatprep.subr.bf16.mxu0 %v1905
    %2042 = vmatpush1.bf16.msra.mxu0 %v1904
    %2043 = vmatprep.subr.bf16.mxu0 %v1907
    %2044 = vmatpush1.bf16.msra.mxu0 %v1906
    %2045 = vmatprep.subr.bf16.mxu0 %v1909
    %2046 = vmatpush1.bf16.msra.mxu0 %v1908
    %2047 = vmatprep.subr.bf16.mxu0 %v1911
    %2048 = vmatpush1.bf16.msra.mxu0 %v1910
    %2049 = vmatprep.subr.bf16.mxu0 %v1913
    %2050 = vmatpush1.bf16.msra.mxu0 %v1912
    %2051 = vmatprep.subr.bf16.mxu0 %v1915
    %2052 = vmatpush1.bf16.msra.mxu0 %v1914
    %2053 = vmatprep.subr.bf16.mxu0 %v1917
    %2054 = vmatpush1.bf16.msra.mxu0 %v1916
    %2055 = vmatprep.subr.bf16.mxu0 %v1919
    %2056 = vmatpush1.bf16.msra.mxu0 %v1918
    %2057 = vmatprep.subr.bf16.mxu0 %v1921
    %2058 = vmatpush1.bf16.msra.mxu0 %v1920
    %2059 = vmatprep.subr.bf16.mxu0 %v1923
    %2060 = vmatpush1.bf16.msra.mxu0 %v1922
    %2061 = vmatprep.subr.bf16.mxu0 %v1925
    %2062 = vmatpush1.bf16.msra.mxu0 %v1924
    %2063 = vmatprep.subr.bf16.mxu0 %v1927
    %2064 = vmatpush1.bf16.msra.mxu0 %v1926
    %2065 = vmatprep.subr.bf16.mxu0 %v1929
    %2066 = vmatpush1.bf16.msra.mxu0 %v1928
    %2067 = vmatprep.mubr.bf16.mxu0 %v1597
    %2068 = vmatmul.mubr.bf16.gmra.mrb[0].mxu0 %v1596
    %v2069 = vpop.f32.mrb[0].mxu0
    %v2070 = vadd.f32 %v2029, %v2069
    %v2071 = vpop.f32.mrb[0].mxu0
    %v2072 = vadd.f32 %v2031, %v2071
    %v2073 = vpop.f32.mrb[0].mxu0
    %v2074 = vpop.f32.mrb[0].mxu0
    %2075 = vdwg.mxu0
    %v2076 = vmax.f32 %v2070, 0.0
    %v2077 = vmax.f32 %v2072, 0.0
    %v2078 = vpack.c.bf16 %v2076, %v2076
    %v2079 = vpack.c.bf16 %v2077, %v2077
    %v2080 = vld [vmem:[#allocation11] sm:$0xf]
    %v2081 = vld [vmem:[#allocation11 + $0x4] sm:$0xf]
    %v2082 = vld [vmem:[#allocation11 + $0x8] sm:$0xf]
    %v2083 = vld [vmem:[#allocation11 + $0xc] sm:$0xf]
    %v2084 = vld [vmem:[#allocation11 + $0x10] sm:$0xf]
    %v2085 = vld [vmem:[#allocation11 + $0x14] sm:$0xf]
    %v2086 = vld [vmem:[#allocation11 + $0x18] sm:$0xf]
    %v2087 = vld [vmem:[#allocation11 + $0x1c] sm:$0xf]
    %v2088 = vld [vmem:[#allocation11 + $0x20] sm:$0xf]
    %v2089 = vld [vmem:[#allocation11 + $0x24] sm:$0xf]
    %v2090 = vld [vmem:[#allocation11 + $0x28] sm:$0xf]
    %v2091 = vld [vmem:[#allocation11 + $0x2c] sm:$0xf]
    %v2092 = vld [vmem:[#allocation11 + $0x30] sm:$0xf]
    %v2093 = vld [vmem:[#allocation11 + $0x34] sm:$0xf]
    %v2094 = vld [vmem:[#allocation11 + $0x38] sm:$0xf]
    %v2095 = vld [vmem:[#allocation11 + $0x3c] sm:$0xf]
    %v2096 = vld [vmem:[#allocation11 + $0x40] sm:$0xf]
    %v2097 = vld [vmem:[#allocation11 + $0x44] sm:$0xf]
    %v2098 = vld [vmem:[#allocation11 + $0x48] sm:$0xf]
    %v2099 = vld [vmem:[#allocation11 + $0x4c] sm:$0xf]
    %v2100 = vld [vmem:[#allocation11 + $0x50] sm:$0xf]
    %v2101 = vld [vmem:[#allocation11 + $0x54] sm:$0xf]
    %v2102 = vld [vmem:[#allocation11 + $0x58] sm:$0xf]
    %v2103 = vld [vmem:[#allocation11 + $0x5c] sm:$0xf]
    %v2104 = vld [vmem:[#allocation11 + $0x60] sm:$0xf]
    %v2105 = vld [vmem:[#allocation11 + $0x64] sm:$0xf]
    %v2106 = vld [vmem:[#allocation11 + $0x68] sm:$0xf]
    %v2107 = vld [vmem:[#allocation11 + $0x6c] sm:$0xf]
    %v2108 = vld [vmem:[#allocation11 + $0x70] sm:$0xf]
    %v2109 = vld [vmem:[#allocation11 + $0x74] sm:$0xf]
    %v2110 = vld [vmem:[#allocation11 + $0x78] sm:$0xf]
    %v2111 = vld [vmem:[#allocation11 + $0x7c] sm:$0xf]
    %v2112 = vld [vmem:[#allocation13] sm:$0x1]
    %v2114 = vlaneseq
    %v2115 = vshrl.u32 %v2114, 7
    %v2116 = vsub.s32 0, %v2115
    %v2117 = vrot.slane %v2112, %v2116
    %v2151 = vunpack.c.l.b16 %v2080
    %v2152 = vunpack.c.l.b16 %v2081
    %v2153 = vunpack.c.l.b16 %v2082
    %v2154 = vunpack.c.l.b16 %v2083
    %v2155 = vunpack.c.l.b16 %v2084
    %v2156 = vunpack.c.l.b16 %v2085
    %v2157 = vunpack.c.l.b16 %v2086
    %v2158 = vunpack.c.l.b16 %v2087
    %v2159 = vunpack.c.l.b16 %v2088
    %v2160 = vunpack.c.l.b16 %v2089
    %v2161 = vunpack.c.l.b16 %v2090
    %v2162 = vunpack.c.l.b16 %v2091
    %v2163 = vunpack.c.l.b16 %v2092
    %v2164 = vunpack.c.l.b16 %v2093
    %v2165 = vunpack.c.l.b16 %v2094
    %v2166 = vunpack.c.l.b16 %v2095
    %v2167 = vunpack.c.l.b16 %v2096
    %v2168 = vunpack.c.l.b16 %v2097
    %v2169 = vunpack.c.l.b16 %v2098
    %v2170 = vunpack.c.l.b16 %v2099
    %v2171 = vunpack.c.l.b16 %v2100
    %v2172 = vunpack.c.l.b16 %v2101
    %v2173 = vunpack.c.l.b16 %v2102
    %v2174 = vunpack.c.l.b16 %v2103
    %v2175 = vunpack.c.l.b16 %v2104
    %v2176 = vunpack.c.l.b16 %v2105
    %v2177 = vunpack.c.l.b16 %v2106
    %v2178 = vunpack.c.l.b16 %v2107
    %v2179 = vunpack.c.l.b16 %v2108
    %v2180 = vunpack.c.l.b16 %v2109
    %v2181 = vunpack.c.l.b16 %v2110
    %v2182 = vunpack.c.l.b16 %v2111
    %v2183 = vpack.c.b16 %v2152, %v2151
    %v2184 = vpack.c.b16 %v2154, %v2153
    %v2185 = vpack.c.b16 %v2156, %v2155
    %v2186 = vpack.c.b16 %v2158, %v2157
    %v2187 = vpack.c.b16 %v2160, %v2159
    %v2188 = vpack.c.b16 %v2162, %v2161
    %v2189 = vpack.c.b16 %v2164, %v2163
    %v2190 = vpack.c.b16 %v2166, %v2165
    %v2191 = vpack.c.b16 %v2168, %v2167
    %v2192 = vpack.c.b16 %v2170, %v2169
    %v2193 = vpack.c.b16 %v2172, %v2171
    %v2194 = vpack.c.b16 %v2174, %v2173
    %v2195 = vpack.c.b16 %v2176, %v2175
    %v2196 = vpack.c.b16 %v2178, %v2177
    %v2197 = vpack.c.b16 %v2180, %v2179
    %v2198 = vpack.c.b16 %v2182, %v2181
    %2215 = vmatprep.subr.bf16.mxu0 0
    %2216 = vmatpush1.bf16.msra.mxu0 %v2183
    %2217 = vmatprep.subr.bf16.mxu0 0
    %2218 = vmatpush1.bf16.msra.mxu0 %v2184
    %2219 = vmatprep.subr.bf16.mxu0 0
    %2220 = vmatpush1.bf16.msra.mxu0 %v2185
    %2221 = vmatprep.subr.bf16.mxu0 0
    %2222 = vmatpush1.bf16.msra.mxu0 %v2186
    %2223 = vmatprep.subr.bf16.mxu0 0
    %2224 = vmatpush1.bf16.msra.mxu0 %v2187
    %2225 = vmatprep.subr.bf16.mxu0 0
    %2226 = vmatpush1.bf16.msra.mxu0 %v2188
    %2227 = vmatprep.subr.bf16.mxu0 0
    %2228 = vmatpush1.bf16.msra.mxu0 %v2189
    %2229 = vmatprep.subr.bf16.mxu0 0
    %2230 = vmatpush1.bf16.msra.mxu0 %v2190
    %2231 = vmatprep.subr.bf16.mxu0 0
    %2232 = vmatpush1.bf16.msra.mxu0 %v2191
    %2233 = vmatprep.subr.bf16.mxu0 0
    %2234 = vmatpush1.bf16.msra.mxu0 %v2192
    %2235 = vmatprep.subr.bf16.mxu0 0
    %2236 = vmatpush1.bf16.msra.mxu0 %v2193
    %2237 = vmatprep.subr.bf16.mxu0 0
    %2238 = vmatpush1.bf16.msra.mxu0 %v2194
    %2239 = vmatprep.subr.bf16.mxu0 0
    %2240 = vmatpush1.bf16.msra.mxu0 %v2195
    %2241 = vmatprep.subr.bf16.mxu0 0
    %2242 = vmatpush1.bf16.msra.mxu0 %v2196
    %2243 = vmatprep.subr.bf16.mxu0 0
    %2244 = vmatpush1.bf16.msra.mxu0 %v2197
    %2245 = vmatprep.subr.bf16.mxu0 0
    %2246 = vmatpush1.bf16.msra.mxu0 %v2198
    %2247 = vmatprep.mubr.bf16.mxu0 %v2079
    %2248 = vmatmul.mubr.bf16.gmra.mrb[0].mxu0 %v2078
    %v2249 = vpop.f32.mrb[0].mxu0
    %v2250 = vadd.f32 %v2117, %v2249
    %v2251 = vpop.f32.mrb[0].mxu0
    %v2252 = vpop.f32.mrb[0].mxu0
    %v2253 = vpop.f32.mrb[0].mxu0
    %2254 = vdwg.mxu0
    %vm2255 = vcmask 1041408
    %v2256 = vsel %vm2255, %v2250, -inf
    %2257 = vmax.xlane.f32.xlu0 %v2256
    %v2258 = vpop.xlane.xlu0 %2257
    %v2259 = vsub.f32 %v2250, %v2258
    %v2260 = vmul.f32 %v2259, 1.442695
    %v2261 = vpow.pop %v2260
    %v2262 = vsel %vm2255, %v2261, 0.0
    %2263 = vadd.xlane.f32.xlu0 %v2262
    %v2264 = vpop.xlane.xlu0 %2263
    %v2265 = vlog2.pop %v2264
    %v2266 = vmul.f32 %v2265, 0.6931472
    %v2267 = vsub.f32 %v2259, %v2266
    %v2268 = vpack.c.bf16 %v2267, %v2267
    %2269 = vst [vmem:[#allocation14] sm:$0x1] %v2268
    // Predicated region
    $region58: #{tpu_custom_call.1} parent=1 // pred_check
      _
    $region59: #{tpu_custom_call.1} parent=1 // pred_check_branch
      %2271 = sbr.rel (0) target = $region61
    $region60: #{tpu_custom_call.1} parent=1 // pred_region
      %s2273 = ssub.s32 16, 16
      %2274 = vsyncadd [#allocation4], %s2273
      %s2276 = sshll.u32 [#allocation14], 4
      %s2277 = int_to_ptr.vmem [resolvable:$true] %s2276
      %2279 = dma.vmem_to_hbm [thread:$0]  %s2277, 16, %s7, [#allocation4]
    $region61: #{tpu_custom_call.1} parent=1 // pred_fallthru
      _
    // Predicated region
    $region62: #{tpu_custom_call.1} parent=1 // pred_check
      _
    $region63: #{tpu_custom_call.1} parent=1 // pred_check_branch
      %2281 = sbr.rel (0) target = $region65
    $region64: #{tpu_custom_call.1} parent=1 // pred_region
      %2282 = dma.done [#allocation4], 16
    $region65: #{tpu_custom_call.1} parent=1 // pred_fallthru
      _
    %2283 = vsyncpa [#allocation3], 1
    %2284 = vsyncpa [#allocation6], 1
    %2285 = vsyncpa [#allocation9], 1
    %2286 = vsyncpa [#allocation12], 1
    %2287 = vsyncpa [#allocation4], 1

</llo_original>
